<compile_context>
chip_gen: v6e
topology: v6e:2x2x1
jax: 0.10.0
libtpu: 0.0.40
codegen_flags: <defaults>
</compile_context>

<pallas_src>
import functools

import jax
import jax.numpy as jnp
from jax.experimental import pallas as pl
from jax.experimental.pallas import tpu as pltpu


def _round_up(x, m):
    return ((x + m - 1) // m) * m


# ----------------------------------------------------------------------------
# Kernel A: one GRU decode step (all layers) + feature MLP (w1, w2).
#   x_ref   : (B, E) f32           embedded token
#   h0_ref  : (L, B, H) f32        previous hidden stack
#   per layer l: wih (3, D_in, H), whh (3, H, H), bih (3, 1, H), bhh (3, 1, H)
#   then:        w1t (H, 2H), b1 (1, 2H), w2t (2H, 4H), b2 (1, 4H)
#   outputs:     feat (B, 4H) bf16,  hidden_new (L, B, H) f32 (aliased on h0)
# ----------------------------------------------------------------------------
def _feature_kernel(n_layers, x_ref, h0_ref, *refs):
    layer_refs = refs[: 4 * n_layers]
    w1_ref, b1_ref, w2_ref, b2_ref = refs[4 * n_layers: 4 * n_layers + 4]
    feat_ref, hid_ref = refs[4 * n_layers + 4:]

    x = x_ref[...]                                            # (B, E)
    for l in range(n_layers):
        wih = layer_refs[4 * l]                               # (3, D_in, H)
        whh = layer_refs[4 * l + 1]                           # (3, H, H)
        bih = layer_refs[4 * l + 2]                           # (3, 1, H)
        bhh = layer_refs[4 * l + 3]                           # (3, 1, H)
        h = h0_ref[l]                                         # (B, H)

        gi_r = jnp.dot(x, wih[0], preferred_element_type=jnp.float32) + bih[0]
        gi_z = jnp.dot(x, wih[1], preferred_element_type=jnp.float32) + bih[1]
        gi_n = jnp.dot(x, wih[2], preferred_element_type=jnp.float32) + bih[2]
        gh_r = jnp.dot(h, whh[0], preferred_element_type=jnp.float32) + bhh[0]
        gh_z = jnp.dot(h, whh[1], preferred_element_type=jnp.float32) + bhh[1]
        gh_n = jnp.dot(h, whh[2], preferred_element_type=jnp.float32) + bhh[2]

        r = jax.nn.sigmoid(gi_r + gh_r)
        z = jax.nn.sigmoid(gi_z + gh_z)
        n = jnp.tanh(gi_n + r * gh_n)
        h_new = (1.0 - z) * n + z * h

        hid_ref[l] = h_new
        x = h_new     # inter-layer dropout = identity (eval mode)

    o1 = jnp.dot(x, w1_ref[...], preferred_element_type=jnp.float32) + b1_ref[...]
    o2 = jnp.dot(o1, w2_ref[...], preferred_element_type=jnp.float32) + b2_ref[...]
    feat_ref[...] = o2.astype(jnp.bfloat16)


# ----------------------------------------------------------------------------
# Kernel B: vocab projection.  (B,4H) bf16 feature x (4H,TV) bf16 weight tile
# -> (B,TV) f32 logits (lane-dense store), grid axis marked "parallel".
# ----------------------------------------------------------------------------
def _vocab_kernel(feat_ref, w3_ref, b3_ref, pred_ref):
    pred_ref[...] = (
        jnp.dot(feat_ref[...], w3_ref[...], preferred_element_type=jnp.float32)
        + b3_ref[...])


# ----------------------------------------------------------------------------
# One-time parameter prep (run OUTSIDE the per-step jit).
# ----------------------------------------------------------------------------
def prepare_decoder_params(params, *, hid_dim, n_layers, vocab_tile=512):
    assert vocab_tile % 128 == 0
    H = 2 * hid_dim
    V, fourH = params["w3"].shape
    assert fourH == 4 * H

    TV = min(vocab_tile, _round_up(V, 128))
    Vp = _round_up(V, TV)

    w3t = jnp.transpose(params["w3"]).astype(jnp.bfloat16)        # (4H, V)
    b3 = params["b3"].reshape(1, -1).astype(jnp.float32)          # (1, V)
    if Vp != V:
        w3t = jnp.pad(w3t, ((0, 0), (0, Vp - V)))
        # Large negative bias in padded logit columns -> no per-step slice
        # needed; downstream argmax/softmax ignore them naturally.
        b3 = jnp.pad(b3, ((0, 0), (0, Vp - V)), constant_values=-1e9)

    layers = []
    for l in range(n_layers):
        p = params["rnn"][l]
        d_in = p["w_ih"].shape[1]
        layers.append(dict(
            # (3H, D) -> (3, D, H): gate-split (PyTorch order r|z|n).
            wih=jnp.transpose(p["w_ih"].reshape(3, H, d_in), (0, 2, 1)).astype(jnp.float32),
            whh=jnp.transpose(p["w_hh"].reshape(3, H, H), (0, 2, 1)).astype(jnp.float32),
            bih=p["b_ih"].reshape(3, 1, H).astype(jnp.float32),
            bhh=p["b_hh"].reshape(3, 1, H).astype(jnp.float32),
        ))

    return dict(
        embedding=params["embedding"].astype(jnp.float32),
        layers=layers,
        w1t=jnp.transpose(params["w1"]).astype(jnp.float32),      # (H, 2H)
        b1=params["b1"].reshape(1, -1).astype(jnp.float32),
        w2t=jnp.transpose(params["w2"]).astype(jnp.float32),      # (2H, 4H)
        b2=params["b2"].reshape(1, -1).astype(jnp.float32),
        w3t=w3t,                                                  # (4H, Vp) bf16
        b3=b3,                                                    # (1, Vp) f32
    )


def pad_decoder_state(hidden, multiple=8):
    """Pad the hidden batch axis to a sublane multiple. Call ONCE before the
    decode loop; padded rows are carried along but never read."""
    L, B, H = hidden.shape
    Bp = max(multiple, _round_up(B, multiple))
    if Bp == B:
        return hidden
    return jnp.pad(hidden, ((0, 0), (0, Bp - B), (0, 0)))


# ----------------------------------------------------------------------------
# Per-step forward: embedding gather (tiny XLA glue) + Kernel A + Kernel B.
# ----------------------------------------------------------------------------
def decoder_forward(prep, inputs, hidden, encoder_outputs=None, *,
                    vocab_tile=512):
    """Eval-mode forward of the PyTorch Decoder (one decode step).
    `hidden` must be batch-padded to a multiple of 8 (pad_decoder_state).
    Returns (prediction (B_pad, V_pad) f32, hidden (L, B_pad, H) f32)."""
    del encoder_outputs            # Attention.forward returns None -> no-op.

    n_layers, B_pad, H = hidden.shape
    assert B_pad % 8 == 0, "pad hidden batch with pad_decoder_state() first"
    assert hidden.dtype == jnp.float32
    assert len(prep["layers"]) == n_layers
    assert prep["w1t"].shape[0] == H
    fourH = prep["w2t"].shape[1]
    Vp = prep["w3t"].shape[1]
    TV = min(vocab_tile, Vp)
    assert Vp % TV == 0 and TV % 128 == 0
    n_tiles = Vp // TV

    # Embedding lookup (dropout = identity in eval mode).
    # TODO(synk): could be fused via PrefetchScalarGridSpec + pl.Element gather.
    B = inputs.shape[0]
    ids = inputs.astype(jnp.int32)
    if B != B_pad:
        ids = jnp.zeros((B_pad,), jnp.int32).at[:B].set(ids)
    x = jnp.take(prep["embedding"], ids, axis=0)                  # (B_pad, E)

    # ---- Kernel A: GRU stack + feature MLP (hidden updated in place) ------
    layer_ops, layer_specs = [], []
    for l in range(n_layers):
        for name in ("wih", "whh", "bih", "bhh"):
            a = prep["layers"][l][name]
            layer_ops.append(a)
            layer_specs.append(pl.BlockSpec(a.shape, lambda i: (0, 0, 0)))

    feat, hidden_new = pl.pallas_call(
        functools.partial(_feature_kernel, n_layers),
        out_shape=(
            jax.ShapeDtypeStruct((B_pad, fourH), jnp.bfloat16),
            jax.ShapeDtypeStruct((n_layers, B_pad, H), jnp.float32),
        ),
        grid=(1,),
        in_specs=[
            pl.BlockSpec(x.shape, lambda i: (0, 0)),
            pl.BlockSpec(hidden.shape, lambda i: (0, 0, 0)),
            *layer_specs,
            pl.BlockSpec(prep["w1t"].shape, lambda i: (0, 0)),
            pl.BlockSpec(prep["b1"].shape, lambda i: (0, 0)),
            pl.BlockSpec(prep["w2t"].shape, lambda i: (0, 0)),
            pl.BlockSpec(prep["b2"].shape, lambda i: (0, 0)),
        ],
        out_specs=(
            pl.BlockSpec((B_pad, fourH), lambda i: (0, 0)),
            pl.BlockSpec((n_layers, B_pad, H), lambda i: (0, 0, 0)),
        ),
        input_output_aliases={1: 1},          # new hidden reuses h0's buffer
        compiler_params=pltpu.CompilerParams(
            dimension_semantics=("arbitrary",)),
    )(x, hidden, *layer_ops,
      prep["w1t"], prep["b1"], prep["w2t"], prep["b2"])

    # ---- Kernel B: vocab projection, parallel grid, bf16 weight stream ----
    prediction = pl.pallas_call(
        _vocab_kernel,
        out_shape=jax.ShapeDtypeStruct((B_pad, Vp), jnp.float32),
        grid=(n_tiles,),
        in_specs=[
            pl.BlockSpec((B_pad, fourH), lambda i: (0, 0)),       # broadcast
            pl.BlockSpec((fourH, TV), lambda i: (0, i)),          # streamed
            pl.BlockSpec((1, TV), lambda i: (0, i)),
        ],
        out_specs=pl.BlockSpec((B_pad, TV), lambda i: (0, i)),    # lane-dense
        compiler_params=pltpu.CompilerParams(
            dimension_semantics=("parallel",),
            vmem_limit_bytes=48 * 1024 * 1024),   # > default scoped, < v7x 64MiB
    )(feat, prep["w3t"], prep["b3"])

    return prediction, hidden_new


# ----------------------------------------------------------------------------
# Pure-JAX reference (mirrors PyTorch math; vocab matmul mirrors bf16 stream).
# ----------------------------------------------------------------------------
def decoder_reference(params, inputs, hidden, *, hid_dim, n_layers):
    H = 2 * hid_dim
    x = params["embedding"][inputs].astype(jnp.float32)
    h_out = []
    for l in range(n_layers):
        p = params["rnn"][l]
        gi = x @ p["w_ih"].T + p["b_ih"]
        gh = hidden[l] @ p["w_hh"].T + p["b_hh"]
        r = jax.nn.sigmoid(gi[:, 0:H] + gh[:, 0:H])
        z = jax.nn.sigmoid(gi[:, H:2 * H] + gh[:, H:2 * H])
        n = jnp.tanh(gi[:, 2 * H:] + r * gh[:, 2 * H:])
        h_new = (1.0 - z) * n + z * hidden[l]
        h_out.append(h_new)
        x = h_new
    o1 = x @ params["w1"].T + params["b1"]
    o2 = o1 @ params["w2"].T + params["b2"]
    o2b = o2.astype(jnp.bfloat16).astype(jnp.float32)
    w3b = params["w3"].astype(jnp.bfloat16).astype(jnp.float32)
    pred = o2b @ w3b.T + params["b3"]
    return pred, jnp.stack(h_out, axis=0)


# ----------------------------------------------------------------------------
# Parameter construction (deterministic, synthetic, PyTorch-shaped)
# ----------------------------------------------------------------------------
def init_decoder_params(key, cn_vocab_size, emb_dim, hid_dim, n_layers):
    H = 2 * hid_dim

    def uniform(k, shape, scale):
        return jax.random.uniform(k, shape, jnp.float32, -1.0, 1.0) * scale

    params = {}
    key, k_emb = jax.random.split(key)
    params["embedding"] = jax.random.normal(
        k_emb, (cn_vocab_size, emb_dim), jnp.float32) * 0.1

    rnn = []
    for layer in range(n_layers):
        in_dim = emb_dim if layer == 0 else H
        key, k1, k2, k3, k4 = jax.random.split(key, 5)
        s = 1.0 / jnp.sqrt(H)
        rnn.append(dict(
            w_ih=uniform(k1, (3 * H, in_dim), s),
            w_hh=uniform(k2, (3 * H, H), s),
            b_ih=uniform(k3, (3 * H,), s),
            b_hh=uniform(k4, (3 * H,), s),
        ))
    params["rnn"] = rnn

    key, k1, k2, k3, k4, k5, k6 = jax.random.split(key, 7)
    params["w1"] = uniform(k1, (2 * H, H), 1.0 / jnp.sqrt(H))
    params["b1"] = uniform(k2, (2 * H,), 1.0 / jnp.sqrt(H))
    params["w2"] = uniform(k3, (4 * H, 2 * H), 1.0 / jnp.sqrt(2 * H))
    params["b2"] = uniform(k4, (4 * H,), 1.0 / jnp.sqrt(2 * H))
    params["w3"] = uniform(k5, (cn_vocab_size, 4 * H), 1.0 / jnp.sqrt(4 * H))
    params["b3"] = uniform(k6, (cn_vocab_size,), 1.0 / jnp.sqrt(4 * H))
    return params


if __name__ == "__main__":
    # Small shapes consistent with the module. cn_vocab_size is deliberately
    # NOT a multiple of the tile so padding + the 2-tile parallel grid run.
    cn_vocab_size = 1000   # padded to 1024 at prep time -> two 512-wide tiles
    emb_dim = 32
    hid_dim = 32           # Decoder internal hidden = hid_dim * 2 = 64
    n_layers = 2
    dropout = 0.5          # identity in eval mode
    isatt = False          # Attention returns None in the reference -> no-op
    B = 2
    T_enc = 8              # encoder_outputs seq length (unused by the forward)

    key = jax.random.PRNGKey(0)
    key, k_params, k_tok, k_hid, k_enc = jax.random.split(key, 5)
    params = init_decoder_params(k_params, cn_vocab_size, emb_dim, hid_dim,
                                 n_layers)
    inputs = jax.random.randint(k_tok, (B,), 0, cn_vocab_size, dtype=jnp.int32)
    hidden = jax.random.normal(k_hid, (n_layers, B, 2 * hid_dim), jnp.float32)
    encoder_outputs = jax.random.normal(
        k_enc, (B, T_enc, 2 * hid_dim), jnp.float32)

    # One-time prep (outside the per-step jit): transposes / padding / bf16.
    prep = prepare_decoder_params(params, hid_dim=hid_dim, n_layers=n_layers,
                                  vocab_tile=512)
    hidden_p = pad_decoder_state(hidden)          # batch 2 -> 8 sublanes, once

    fwd = jax.jit(decoder_forward)
    pred_p, hidden_new_p = fwd(prep, inputs, hidden_p, encoder_outputs)
    jax.block_until_ready((pred_p, hidden_new_p))

    B_pad = hidden_p.shape[1]
    Vp = prep["w3t"].shape[1]
    assert pred_p.shape == (B_pad, Vp)
    assert hidden_new_p.shape == (n_layers, B_pad, 2 * hid_dim)

    prediction = pred_p[:B, :cn_vocab_size]
    hidden_new = hidden_new_p[:, :B, :]
    pred_ref, hidden_ref = decoder_reference(
        params, inputs, hidden, hid_dim=hid_dim, n_layers=n_layers)

    assert prediction.shape == (B, cn_vocab_size)
    assert hidden_new.shape == (n_layers, B, 2 * hid_dim)
    assert bool(jnp.all(jnp.isfinite(prediction)))
    assert bool(jnp.all(jnp.isfinite(hidden_new)))
    assert bool(jnp.allclose(hidden_new, hidden_ref, rtol=2e-2, atol=2e-2)), \
        float(jnp.max(jnp.abs(hidden_new - hidden_ref)))
    assert bool(jnp.allclose(prediction, pred_ref, rtol=2e-2, atol=2e-2)), \
        float(jnp.max(jnp.abs(prediction - pred_ref)))
    print("KERNEL_OK")
</pallas_src>

<mosaic_0001>
module attributes {stable_mosaic.version = 11 : i64} {
  func.func @_vocab_kernel(%arg0: i32, %arg1: memref<8x256xbf16, #tpu.memory_space<vmem>>, %arg2: memref<256x512xbf16, #tpu.memory_space<vmem>>, %arg3: memref<1x512xf32, #tpu.memory_space<vmem>>, %arg4: memref<8x512xf32, #tpu.memory_space<vmem>>) attributes {dimension_semantics = [#tpu.dimension_semantics<parallel>], iteration_bounds = array<i64: 2>, scalar_prefetch = 0 : i64, scratch_operands = 0 : i64, tpu.core_type = #tpu.core_type<tc>, window_params = [{pipeline_mode = #tpu.pipeline_mode<synchronous>, transform_indices = @transform_0, window_bounds = array<i64: 8, 256>}, {transform_indices = @transform_1, window_bounds = array<i64: 256, 512>}, {transform_indices = @transform_2, window_bounds = array<i64: 1, 512>}, {transform_indices = @transform_3, window_bounds = array<i64: 8, 512>}]} {
    %c0 = arith.constant 0 : index
    %c0_0 = arith.constant 0 : index
    %0 = vector.load %arg1[%c0, %c0_0] : memref<8x256xbf16, #tpu.memory_space<vmem>>, vector<8x256xbf16>
    %c0_1 = arith.constant 0 : index
    %c0_2 = arith.constant 0 : index
    %1 = vector.load %arg2[%c0_1, %c0_2] : memref<256x512xbf16, #tpu.memory_space<vmem>>, vector<256x512xbf16>
    %cst = arith.constant dense<0.000000e+00> : vector<8x512xf32>
    %2 = tpu.matmul %0, %1, %cst {dimension_numbers = #tpu.dot_dimension_numbers<[1], [0], [0], [1], [0, 0, 1, 1], [], []>} : vector<8x256xbf16>, vector<256x512xbf16>, vector<8x512xf32> -> vector<8x512xf32>
    %c0_3 = arith.constant 0 : index
    %c0_4 = arith.constant 0 : index
    %3 = vector.load %arg3[%c0_3, %c0_4] : memref<1x512xf32, #tpu.memory_space<vmem>>, vector<1x512xf32>
    %4 = vector.broadcast %3 : vector<1x512xf32> to vector<8x512xf32>
    %5 = arith.addf %2, %4 : vector<8x512xf32>
    %c0_5 = arith.constant 0 : index
    %c0_6 = arith.constant 0 : index
    %6 = vector.load %arg4[%c0_5, %c0_6] : memref<8x512xf32, #tpu.memory_space<vmem>>, vector<8x512xf32>
    tpu.vector_store %arg4[%c0_5, %c0_6], %5 {strides = array<i32>} : memref<8x512xf32, #tpu.memory_space<vmem>>, vector<8x512xf32>,
    return
  }
  func.func @transform_0(%arg0: i32) -> (i32, i32) {
    %c0_i32 = arith.constant 0 : i32
    %c0_i32_0 = arith.constant 0 : i32
    %c0_i32_1 = arith.constant 0 : i32
    return %c0_i32, %c0_i32_0 : i32, i32
  }
  func.func @transform_1(%arg0: i32) -> (i32, i32) {
    %c0_i32 = arith.constant 0 : i32
    %c0_i32_0 = arith.constant 0 : i32
    return %c0_i32, %arg0 : i32, i32
  }
  func.func @transform_2(%arg0: i32) -> (i32, i32) {
    %c0_i32 = arith.constant 0 : i32
    %c0_i32_0 = arith.constant 0 : i32
    return %c0_i32, %arg0 : i32, i32
  }
  func.func @transform_3(%arg0: i32) -> (i32, i32) {
    %c0_i32 = arith.constant 0 : i32
    %c0_i32_0 = arith.constant 0 : i32
    return %c0_i32, %arg0 : i32, i32
  }
}

module attributes {stable_mosaic.version = 11 : i64} {
  func.func @_feature_kernel(%arg0: i32, %arg1: memref<8x32xf32, #tpu.memory_space<vmem>>, %arg2: memref<2x8x64xf32, #tpu.memory_space<vmem>>, %arg3: memref<3x32x64xf32, #tpu.memory_space<vmem>>, %arg4: memref<3x64x64xf32, #tpu.memory_space<vmem>>, %arg5: memref<3x1x64xf32, #tpu.memory_space<vmem>>, %arg6: memref<3x1x64xf32, #tpu.memory_space<vmem>>, %arg7: memref<3x64x64xf32, #tpu.memory_space<vmem>>, %arg8: memref<3x64x64xf32, #tpu.memory_space<vmem>>, %arg9: memref<3x1x64xf32, #tpu.memory_space<vmem>>, %arg10: memref<3x1x64xf32, #tpu.memory_space<vmem>>, %arg11: memref<64x128xf32, #tpu.memory_space<vmem>>, %arg12: memref<1x128xf32, #tpu.memory_space<vmem>>, %arg13: memref<128x256xf32, #tpu.memory_space<vmem>>, %arg14: memref<1x256xf32, #tpu.memory_space<vmem>>, %arg15: memref<8x256xbf16, #tpu.memory_space<vmem>>, %arg16: memref<2x8x64xf32, #tpu.memory_space<vmem>>) attributes {dimension_semantics = [#tpu.dimension_semantics<arbitrary>], iteration_bounds = array<i64: 1>, scalar_prefetch = 0 : i64, scratch_operands = 0 : i64, tpu.core_type = #tpu.core_type<tc>, window_params = [{pipeline_mode = #tpu.pipeline_mode<synchronous>, transform_indices = @transform_0, window_bounds = array<i64: 8, 32>}, {pipeline_mode = #tpu.pipeline_mode<synchronous>, transform_indices = @transform_1, window_bounds = array<i64: 2, 8, 64>}, {pipeline_mode = #tpu.pipeline_mode<synchronous>, transform_indices = @transform_2, window_bounds = array<i64: 3, 32, 64>}, {pipeline_mode = #tpu.pipeline_mode<synchronous>, transform_indices = @transform_3, window_bounds = array<i64: 3, 64, 64>}, {pipeline_mode = #tpu.pipeline_mode<synchronous>, transform_indices = @transform_4, window_bounds = array<i64: 3, 1, 64>}, {pipeline_mode = #tpu.pipeline_mode<synchronous>, transform_indices = @transform_5, window_bounds = array<i64: 3, 1, 64>}, {pipeline_mode = #tpu.pipeline_mode<synchronous>, transform_indices = @transform_6, window_bounds = array<i64: 3, 64, 64>}, {pipeline_mode = #tpu.pipeline_mode<synchronous>, transform_indices = @transform_7, window_bounds = array<i64: 3, 64, 64>}, {pipeline_mode = #tpu.pipeline_mode<synchronous>, transform_indices = @transform_8, window_bounds = array<i64: 3, 1, 64>}, {pipeline_mode = #tpu.pipeline_mode<synchronous>, transform_indices = @transform_9, window_bounds = array<i64: 3, 1, 64>}, {pipeline_mode = #tpu.pipeline_mode<synchronous>, transform_indices = @transform_10, window_bounds = array<i64: 64, 128>}, {pipeline_mode = #tpu.pipeline_mode<synchronous>, transform_indices = @transform_11, window_bounds = array<i64: 1, 128>}, {pipeline_mode = #tpu.pipeline_mode<synchronous>, transform_indices = @transform_12, window_bounds = array<i64: 128, 256>}, {pipeline_mode = #tpu.pipeline_mode<synchronous>, transform_indices = @transform_13, window_bounds = array<i64: 1, 256>}, {pipeline_mode = #tpu.pipeline_mode<synchronous>, transform_indices = @transform_14, window_bounds = array<i64: 8, 256>}, {pipeline_mode = #tpu.pipeline_mode<synchronous>, transform_indices = @transform_15, window_bounds = array<i64: 2, 8, 64>}]} {
    %c0 = arith.constant 0 : index
    %c0_0 = arith.constant 0 : index
    %0 = vector.load %arg1[%c0, %c0_0] : memref<8x32xf32, #tpu.memory_space<vmem>>, vector<8x32xf32>
    %c0_1 = arith.constant 0 : index
    %c0_2 = arith.constant 0 : index
    %c0_3 = arith.constant 0 : index
    %1 = vector.load %arg2[%c0_1, %c0_2, %c0_3] : memref<2x8x64xf32, #tpu.memory_space<vmem>>, vector<1x8x64xf32>
    %2 = vector.shape_cast %1 : vector<1x8x64xf32> to vector<8x64xf32>
    %c0_4 = arith.constant 0 : index
    %c0_5 = arith.constant 0 : index
    %c0_6 = arith.constant 0 : index
    %3 = vector.load %arg3[%c0_4, %c0_5, %c0_6] : memref<3x32x64xf32, #tpu.memory_space<vmem>>, vector<1x32x64xf32>
    %4 = vector.shape_cast %3 : vector<1x32x64xf32> to vector<32x64xf32>
    %cst = arith.constant dense<0.000000e+00> : vector<8x64xf32>
    %5 = tpu.matmul %0, %4, %cst {dimension_numbers = #tpu.dot_dimension_numbers<[1], [0], [0], [1], [0, 0, 1, 1], [], []>} : vector<8x32xf32>, vector<32x64xf32>, vector<8x64xf32> -> vector<8x64xf32>
    %c0_7 = arith.constant 0 : index
    %c0_8 = arith.constant 0 : index
    %c0_9 = arith.constant 0 : index
    %6 = vector.load %arg5[%c0_7, %c0_8, %c0_9] : memref<3x1x64xf32, #tpu.memory_space<vmem>>, vector<1x1x64xf32>
    %7 = vector.shape_cast %6 : vector<1x1x64xf32> to vector<1x64xf32>
    %8 = vector.broadcast %7 : vector<1x64xf32> to vector<8x64xf32>
    %9 = arith.addf %5, %8 : vector<8x64xf32>
    %c1 = arith.constant 1 : index
    %c0_10 = arith.constant 0 : index
    %c0_11 = arith.constant 0 : index
    %10 = vector.load %arg3[%c1, %c0_10, %c0_11] : memref<3x32x64xf32, #tpu.memory_space<vmem>>, vector<1x32x64xf32>
    %11 = vector.shape_cast %10 : vector<1x32x64xf32> to vector<32x64xf32>
    %cst_12 = arith.constant dense<0.000000e+00> : vector<8x64xf32>
    %12 = tpu.matmul %0, %11, %cst_12 {dimension_numbers = #tpu.dot_dimension_numbers<[1], [0], [0], [1], [0, 0, 1, 1], [], []>} : vector<8x32xf32>, vector<32x64xf32>, vector<8x64xf32> -> vector<8x64xf32>
    %c1_13 = arith.constant 1 : index
    %c0_14 = arith.constant 0 : index
    %c0_15 = arith.constant 0 : index
    %13 = vector.load %arg5[%c1_13, %c0_14, %c0_15] : memref<3x1x64xf32, #tpu.memory_space<vmem>>, vector<1x1x64xf32>
    %14 = vector.shape_cast %13 : vector<1x1x64xf32> to vector<1x64xf32>
    %15 = vector.broadcast %14 : vector<1x64xf32> to vector<8x64xf32>
    %16 = arith.addf %12, %15 : vector<8x64xf32>
    %c2 = arith.constant 2 : index
    %c0_16 = arith.constant 0 : index
    %c0_17 = arith.constant 0 : index
    %17 = vector.load %arg3[%c2, %c0_16, %c0_17] : memref<3x32x64xf32, #tpu.memory_space<vmem>>, vector<1x32x64xf32>
    %18 = vector.shape_cast %17 : vector<1x32x64xf32> to vector<32x64xf32>
    %cst_18 = arith.constant dense<0.000000e+00> : vector<8x64xf32>
    %19 = tpu.matmul %0, %18, %cst_18 {dimension_numbers = #tpu.dot_dimension_numbers<[1], [0], [0], [1], [0, 0, 1, 1], [], []>} : vector<8x32xf32>, vector<32x64xf32>, vector<8x64xf32> -> vector<8x64xf32>
    %c2_19 = arith.constant 2 : index
    %c0_20 = arith.constant 0 : index
    %c0_21 = arith.constant 0 : index
    %20 = vector.load %arg5[%c2_19, %c0_20, %c0_21] : memref<3x1x64xf32, #tpu.memory_space<vmem>>, vector<1x1x64xf32>
    %21 = vector.shape_cast %20 : vector<1x1x64xf32> to vector<1x64xf32>
    %22 = vector.broadcast %21 : vector<1x64xf32> to vector<8x64xf32>
    %23 = arith.addf %19, %22 : vector<8x64xf32>
    %c0_22 = arith.constant 0 : index
    %c0_23 = arith.constant 0 : index
    %c0_24 = arith.constant 0 : index
    %24 = vector.load %arg4[%c0_22, %c0_23, %c0_24] : memref<3x64x64xf32, #tpu.memory_space<vmem>>, vector<1x64x64xf32>
    %25 = vector.shape_cast %24 : vector<1x64x64xf32> to vector<64x64xf32>
    %cst_25 = arith.constant dense<0.000000e+00> : vector<8x64xf32>
    %26 = tpu.matmul %2, %25, %cst_25 {dimension_numbers = #tpu.dot_dimension_numbers<[1], [0], [0], [1], [0, 0, 1, 1], [], []>} : vector<8x64xf32>, vector<64x64xf32>, vector<8x64xf32> -> vector<8x64xf32>
    %c0_26 = arith.constant 0 : index
    %c0_27 = arith.constant 0 : index
    %c0_28 = arith.constant 0 : index
    %27 = vector.load %arg6[%c0_26, %c0_27, %c0_28] : memref<3x1x64xf32, #tpu.memory_space<vmem>>, vector<1x1x64xf32>
    %28 = vector.shape_cast %27 : vector<1x1x64xf32> to vector<1x64xf32>
    %29 = vector.broadcast %28 : vector<1x64xf32> to vector<8x64xf32>
    %30 = arith.addf %26, %29 : vector<8x64xf32>
    %c1_29 = arith.constant 1 : index
    %c0_30 = arith.constant 0 : index
    %c0_31 = arith.constant 0 : index
    %31 = vector.load %arg4[%c1_29, %c0_30, %c0_31] : memref<3x64x64xf32, #tpu.memory_space<vmem>>, vector<1x64x64xf32>
    %32 = vector.shape_cast %31 : vector<1x64x64xf32> to vector<64x64xf32>
    %cst_32 = arith.constant dense<0.000000e+00> : vector<8x64xf32>
    %33 = tpu.matmul %2, %32, %cst_32 {dimension_numbers = #tpu.dot_dimension_numbers<[1], [0], [0], [1], [0, 0, 1, 1], [], []>} : vector<8x64xf32>, vector<64x64xf32>, vector<8x64xf32> -> vector<8x64xf32>
    %c1_33 = arith.constant 1 : index
    %c0_34 = arith.constant 0 : index
    %c0_35 = arith.constant 0 : index
    %34 = vector.load %arg6[%c1_33, %c0_34, %c0_35] : memref<3x1x64xf32, #tpu.memory_space<vmem>>, vector<1x1x64xf32>
    %35 = vector.shape_cast %34 : vector<1x1x64xf32> to vector<1x64xf32>
    %36 = vector.broadcast %35 : vector<1x64xf32> to vector<8x64xf32>
    %37 = arith.addf %33, %36 : vector<8x64xf32>
    %c2_36 = arith.constant 2 : index
    %c0_37 = arith.constant 0 : index
    %c0_38 = arith.constant 0 : index
    %38 = vector.load %arg4[%c2_36, %c0_37, %c0_38] : memref<3x64x64xf32, #tpu.memory_space<vmem>>, vector<1x64x64xf32>
    %39 = vector.shape_cast %38 : vector<1x64x64xf32> to vector<64x64xf32>
    %cst_39 = arith.constant dense<0.000000e+00> : vector<8x64xf32>
    %40 = tpu.matmul %2, %39, %cst_39 {dimension_numbers = #tpu.dot_dimension_numbers<[1], [0], [0], [1], [0, 0, 1, 1], [], []>} : vector<8x64xf32>, vector<64x64xf32>, vector<8x64xf32> -> vector<8x64xf32>
    %c2_40 = arith.constant 2 : index
    %c0_41 = arith.constant 0 : index
    %c0_42 = arith.constant 0 : index
    %41 = vector.load %arg6[%c2_40, %c0_41, %c0_42] : memref<3x1x64xf32, #tpu.memory_space<vmem>>, vector<1x1x64xf32>
    %42 = vector.shape_cast %41 : vector<1x1x64xf32> to vector<1x64xf32>
    %43 = vector.broadcast %42 : vector<1x64xf32> to vector<8x64xf32>
    %44 = arith.addf %40, %43 : vector<8x64xf32>
    %45 = arith.addf %9, %30 : vector<8x64xf32>
    %46 = arith.negf %45 : vector<8x64xf32>
    %47 = math.exp %46 : vector<8x64xf32>
    %cst_43 = arith.constant 1.000000e+00 : f32
    %48 = vector.broadcast %cst_43 : f32 to vector<8x64xf32>
    %49 = arith.addf %48, %47 : vector<8x64xf32>
    %50 = arith.divf %48, %49 : vector<8x64xf32>
    %51 = arith.addf %16, %37 : vector<8x64xf32>
    %52 = arith.negf %51 : vector<8x64xf32>
    %53 = math.exp %52 : vector<8x64xf32>
    %cst_44 = arith.constant 1.000000e+00 : f32
    %54 = vector.broadcast %cst_44 : f32 to vector<8x64xf32>
    %55 = arith.addf %54, %53 : vector<8x64xf32>
    %56 = arith.divf %54, %55 : vector<8x64xf32>
    %57 = arith.mulf %50, %44 : vector<8x64xf32>
    %58 = arith.addf %23, %57 : vector<8x64xf32>
    %59 = math.tanh %58 : vector<8x64xf32>
    %cst_45 = arith.constant 1.000000e+00 : f32
    %60 = vector.broadcast %cst_45 : f32 to vector<8x64xf32>
    %61 = arith.subf %60, %56 : vector<8x64xf32>
    %62 = arith.mulf %61, %59 : vector<8x64xf32>
    %63 = arith.mulf %56, %2 : vector<8x64xf32>
    %64 = arith.addf %62, %63 : vector<8x64xf32>
    %c0_46 = arith.constant 0 : index
    %c0_47 = arith.constant 0 : index
    %c0_48 = arith.constant 0 : index
    %65 = vector.load %arg16[%c0_46, %c0_47, %c0_48] : memref<2x8x64xf32, #tpu.memory_space<vmem>>, vector<1x8x64xf32>
    %66 = vector.shape_cast %65 : vector<1x8x64xf32> to vector<8x64xf32>
    %67 = vector.shape_cast %64 : vector<8x64xf32> to vector<1x8x64xf32>
    tpu.vector_store %arg16[%c0_46, %c0_47, %c0_48], %67 {strides = array<i32>} : memref<2x8x64xf32, #tpu.memory_space<vmem>>, vector<1x8x64xf32>,
    %c1_49 = arith.constant 1 : index
    %c0_50 = arith.constant 0 : index
    %c0_51 = arith.constant 0 : index
    %68 = vector.load %arg2[%c1_49, %c0_50, %c0_51] : memref<2x8x64xf32, #tpu.memory_space<vmem>>, vector<1x8x64xf32>
    %69 = vector.shape_cast %68 : vector<1x8x64xf32> to vector<8x64xf32>
    %c0_52 = arith.constant 0 : index
    %c0_53 = arith.constant 0 : index
    %c0_54 = arith.constant 0 : index
    %70 = vector.load %arg7[%c0_52, %c0_53, %c0_54] : memref<3x64x64xf32, #tpu.memory_space<vmem>>, vector<1x64x64xf32>
    %71 = vector.shape_cast %70 : vector<1x64x64xf32> to vector<64x64xf32>
    %cst_55 = arith.constant dense<0.000000e+00> : vector<8x64xf32>
    %72 = tpu.matmul %64, %71, %cst_55 {dimension_numbers = #tpu.dot_dimension_numbers<[1], [0], [0], [1], [0, 0, 1, 1], [], []>} : vector<8x64xf32>, vector<64x64xf32>, vector<8x64xf32> -> vector<8x64xf32>
    %c0_56 = arith.constant 0 : index
    %c0_57 = arith.constant 0 : index
    %c0_58 = arith.constant 0 : index
    %73 = vector.load %arg9[%c0_56, %c0_57, %c0_58] : memref<3x1x64xf32, #tpu.memory_space<vmem>>, vector<1x1x64xf32>
    %74 = vector.shape_cast %73 : vector<1x1x64xf32> to vector<1x64xf32>
    %75 = vector.broadcast %74 : vector<1x64xf32> to vector<8x64xf32>
    %76 = arith.addf %72, %75 : vector<8x64xf32>
    %c1_59 = arith.constant 1 : index
    %c0_60 = arith.constant 0 : index
    %c0_61 = arith.constant 0 : index
    %77 = vector.load %arg7[%c1_59, %c0_60, %c0_61] : memref<3x64x64xf32, #tpu.memory_space<vmem>>, vector<1x64x64xf32>
    %78 = vector.shape_cast %77 : vector<1x64x64xf32> to vector<64x64xf32>
    %cst_62 = arith.constant dense<0.000000e+00> : vector<8x64xf32>
    %79 = tpu.matmul %64, %78, %cst_62 {dimension_numbers = #tpu.dot_dimension_numbers<[1], [0], [0], [1], [0, 0, 1, 1], [], []>} : vector<8x64xf32>, vector<64x64xf32>, vector<8x64xf32> -> vector<8x64xf32>
    %c1_63 = arith.constant 1 : index
    %c0_64 = arith.constant 0 : index
    %c0_65 = arith.constant 0 : index
    %80 = vector.load %arg9[%c1_63, %c0_64, %c0_65] : memref<3x1x64xf32, #tpu.memory_space<vmem>>, vector<1x1x64xf32>
    %81 = vector.shape_cast %80 : vector<1x1x64xf32> to vector<1x64xf32>
    %82 = vector.broadcast %81 : vector<1x64xf32> to vector<8x64xf32>
    %83 = arith.addf %79, %82 : vector<8x64xf32>
    %c2_66 = arith.constant 2 : index
    %c0_67 = arith.constant 0 : index
    %c0_68 = arith.constant 0 : index
    %84 = vector.load %arg7[%c2_66, %c0_67, %c0_68] : memref<3x64x64xf32, #tpu.memory_space<vmem>>, vector<1x64x64xf32>
    %85 = vector.shape_cast %84 : vector<1x64x64xf32> to vector<64x64xf32>
    %cst_69 = arith.constant dense<0.000000e+00> : vector<8x64xf32>
    %86 = tpu.matmul %64, %85, %cst_69 {dimension_numbers = #tpu.dot_dimension_numbers<[1], [0], [0], [1], [0, 0, 1, 1], [], []>} : vector<8x64xf32>, vector<64x64xf32>, vector<8x64xf32> -> vector<8x64xf32>
    %c2_70 = arith.constant 2 : index
    %c0_71 = arith.constant 0 : index
    %c0_72 = arith.constant 0 : index
    %87 = vector.load %arg9[%c2_70, %c0_71, %c0_72] : memref<3x1x64xf32, #tpu.memory_space<vmem>>, vector<1x1x64xf32>
    %88 = vector.shape_cast %87 : vector<1x1x64xf32> to vector<1x64xf32>
    %89 = vector.broadcast %88 : vector<1x64xf32> to vector<8x64xf32>
    %90 = arith.addf %86, %89 : vector<8x64xf32>
    %c0_73 = arith.constant 0 : index
    %c0_74 = arith.constant 0 : index
    %c0_75 = arith.constant 0 : index
    %91 = vector.load %arg8[%c0_73, %c0_74, %c0_75] : memref<3x64x64xf32, #tpu.memory_space<vmem>>, vector<1x64x64xf32>
    %92 = vector.shape_cast %91 : vector<1x64x64xf32> to vector<64x64xf32>
    %cst_76 = arith.constant dense<0.000000e+00> : vector<8x64xf32>
    %93 = tpu.matmul %69, %92, %cst_76 {dimension_numbers = #tpu.dot_dimension_numbers<[1], [0], [0], [1], [0, 0, 1, 1], [], []>} : vector<8x64xf32>, vector<64x64xf32>, vector<8x64xf32> -> vector<8x64xf32>
    %c0_77 = arith.constant 0 : index
    %c0_78 = arith.constant 0 : index
    %c0_79 = arith.constant 0 : index
    %94 = vector.load %arg10[%c0_77, %c0_78, %c0_79] : memref<3x1x64xf32, #tpu.memory_space<vmem>>, vector<1x1x64xf32>
    %95 = vector.shape_cast %94 : vector<1x1x64xf32> to vector<1x64xf32>
    %96 = vector.broadcast %95 : vector<1x64xf32> to vector<8x64xf32>
    %97 = arith.addf %93, %96 : vector<8x64xf32>
    %c1_80 = arith.constant 1 : index
    %c0_81 = arith.constant 0 : index
    %c0_82 = arith.constant 0 : index
    %98 = vector.load %arg8[%c1_80, %c0_81, %c0_82] : memref<3x64x64xf32, #tpu.memory_space<vmem>>, vector<1x64x64xf32>
    %99 = vector.shape_cast %98 : vector<1x64x64xf32> to vector<64x64xf32>
    %cst_83 = arith.constant dense<0.000000e+00> : vector<8x64xf32>
    %100 = tpu.matmul %69, %99, %cst_83 {dimension_numbers = #tpu.dot_dimension_numbers<[1], [0], [0], [1], [0, 0, 1, 1], [], []>} : vector<8x64xf32>, vector<64x64xf32>, vector<8x64xf32> -> vector<8x64xf32>
    %c1_84 = arith.constant 1 : index
    %c0_85 = arith.constant 0 : index
    %c0_86 = arith.constant 0 : index
    %101 = vector.load %arg10[%c1_84, %c0_85, %c0_86] : memref<3x1x64xf32, #tpu.memory_space<vmem>>, vector<1x1x64xf32>
    %102 = vector.shape_cast %101 : vector<1x1x64xf32> to vector<1x64xf32>
    %103 = vector.broadcast %102 : vector<1x64xf32> to vector<8x64xf32>
    %104 = arith.addf %100, %103 : vector<8x64xf32>
    %c2_87 = arith.constant 2 : index
    %c0_88 = arith.constant 0 : index
    %c0_89 = arith.constant 0 : index
    %105 = vector.load %arg8[%c2_87, %c0_88, %c0_89] : memref<3x64x64xf32, #tpu.memory_space<vmem>>, vector<1x64x64xf32>
    %106 = vector.shape_cast %105 : vector<1x64x64xf32> to vector<64x64xf32>
    %cst_90 = arith.constant dense<0.000000e+00> : vector<8x64xf32>
    %107 = tpu.matmul %69, %106, %cst_90 {dimension_numbers = #tpu.dot_dimension_numbers<[1], [0], [0], [1], [0, 0, 1, 1], [], []>} : vector<8x64xf32>, vector<64x64xf32>, vector<8x64xf32> -> vector<8x64xf32>
    %c2_91 = arith.constant 2 : index
    %c0_92 = arith.constant 0 : index
    %c0_93 = arith.constant 0 : index
    %108 = vector.load %arg10[%c2_91, %c0_92, %c0_93] : memref<3x1x64xf32, #tpu.memory_space<vmem>>, vector<1x1x64xf32>
    %109 = vector.shape_cast %108 : vector<1x1x64xf32> to vector<1x64xf32>
    %110 = vector.broadcast %109 : vector<1x64xf32> to vector<8x64xf32>
    %111 = arith.addf %107, %110 : vector<8x64xf32>
    %112 = arith.addf %76, %97 : vector<8x64xf32>
    %113 = arith.negf %112 : vector<8x64xf32>
    %114 = math.exp %113 : vector<8x64xf32>
    %cst_94 = arith.constant 1.000000e+00 : f32
    %115 = vector.broadcast %cst_94 : f32 to vector<8x64xf32>
    %116 = arith.addf %115, %114 : vector<8x64xf32>
    %117 = arith.divf %115, %116 : vector<8x64xf32>
    %118 = arith.addf %83, %104 : vector<8x64xf32>
    %119 = arith.negf %118 : vector<8x64xf32>
    %120 = math.exp %119 : vector<8x64xf32>
    %cst_95 = arith.constant 1.000000e+00 : f32
    %121 = vector.broadcast %cst_95 : f32 to vector<8x64xf32>
    %122 = arith.addf %121, %120 : vector<8x64xf32>
    %123 = arith.divf %121, %122 : vector<8x64xf32>
    %124 = arith.mulf %117, %111 : vector<8x64xf32>
    %125 = arith.addf %90, %124 : vector<8x64xf32>
    %126 = math.tanh %125 : vector<8x64xf32>
    %cst_96 = arith.constant 1.000000e+00 : f32
    %127 = vector.broadcast %cst_96 : f32 to vector<8x64xf32>
    %128 = arith.subf %127, %123 : vector<8x64xf32>
    %129 = arith.mulf %128, %126 : vector<8x64xf32>
    %130 = arith.mulf %123, %69 : vector<8x64xf32>
    %131 = arith.addf %129, %130 : vector<8x64xf32>
    %c1_97 = arith.constant 1 : index
    %c0_98 = arith.constant 0 : index
    %c0_99 = arith.constant 0 : index
    %132 = vector.load %arg16[%c1_97, %c0_98, %c0_99] : memref<2x8x64xf32, #tpu.memory_space<vmem>>, vector<1x8x64xf32>
    %133 = vector.shape_cast %132 : vector<1x8x64xf32> to vector<8x64xf32>
    %134 = vector.shape_cast %131 : vector<8x64xf32> to vector<1x8x64xf32>
    tpu.vector_store %arg16[%c1_97, %c0_98, %c0_99], %134 {strides = array<i32>} : memref<2x8x64xf32, #tpu.memory_space<vmem>>, vector<1x8x64xf32>,
    %c0_100 = arith.constant 0 : index
    %c0_101 = arith.constant 0 : index
    %135 = vector.load %arg11[%c0_100, %c0_101] : memref<64x128xf32, #tpu.memory_space<vmem>>, vector<64x128xf32>
    %cst_102 = arith.constant dense<0.000000e+00> : vector<8x128xf32>
    %136 = tpu.matmul %131, %135, %cst_102 {dimension_numbers = #tpu.dot_dimension_numbers<[1], [0], [0], [1], [0, 0, 1, 1], [], []>} : vector<8x64xf32>, vector<64x128xf32>, vector<8x128xf32> -> vector<8x128xf32>
    %c0_103 = arith.constant 0 : index
    %c0_104 = arith.constant 0 : index
    %137 = vector.load %arg12[%c0_103, %c0_104] : memref<1x128xf32, #tpu.memory_space<vmem>>, vector<1x128xf32>
    %138 = vector.broadcast %137 : vector<1x128xf32> to vector<8x128xf32>
    %139 = arith.addf %136, %138 : vector<8x128xf32>
    %c0_105 = arith.constant 0 : index
    %c0_106 = arith.constant 0 : index
    %140 = vector.load %arg13[%c0_105, %c0_106] : memref<128x256xf32, #tpu.memory_space<vmem>>, vector<128x256xf32>
    %cst_107 = arith.constant dense<0.000000e+00> : vector<8x256xf32>
    %141 = tpu.matmul %139, %140, %cst_107 {dimension_numbers = #tpu.dot_dimension_numbers<[1], [0], [0], [1], [0, 0, 1, 1], [], []>} : vector<8x128xf32>, vector<128x256xf32>, vector<8x256xf32> -> vector<8x256xf32>
    %c0_108 = arith.constant 0 : index
    %c0_109 = arith.constant 0 : index
    %142 = vector.load %arg14[%c0_108, %c0_109] : memref<1x256xf32, #tpu.memory_space<vmem>>, vector<1x256xf32>
    %143 = vector.broadcast %142 : vector<1x256xf32> to vector<8x256xf32>
    %144 = arith.addf %141, %143 : vector<8x256xf32>
    %145 = arith.truncf %144 : vector<8x256xf32> to vector<8x256xbf16>
    %c0_110 = arith.constant 0 : index
    %c0_111 = arith.constant 0 : index
    %146 = vector.load %arg15[%c0_110, %c0_111] : memref<8x256xbf16, #tpu.memory_space<vmem>>, vector<8x256xbf16>
    tpu.vector_store %arg15[%c0_110, %c0_111], %145 {strides = array<i32>} : memref<8x256xbf16, #tpu.memory_space<vmem>>, vector<8x256xbf16>,
    return
  }
  func.func @transform_0(%arg0: i32) -> (i32, i32) {
    %c0_i32 = arith.constant 0 : i32
    %c0_i32_0 = arith.constant 0 : i32
    %c0_i32_1 = arith.constant 0 : i32
    return %c0_i32, %c0_i32_0 : i32, i32
  }
  func.func @transform_1(%arg0: i32) -> (i32, i32, i32) {
    %c0_i32 = arith.constant 0 : i32
    %c0_i32_0 = arith.constant 0 : i32
    %c0_i32_1 = arith.constant 0 : i32
    %c0_i32_2 = arith.constant 0 : i32
    return %c0_i32, %c0_i32_0, %c0_i32_1 : i32, i32, i32
  }
  func.func @transform_2(%arg0: i32) -> (i32, i32, i32) {
    %c0_i32 = arith.constant 0 : i32
    %c0_i32_0 = arith.constant 0 : i32
    %c0_i32_1 = arith.constant 0 : i32
    %c0_i32_2 = arith.constant 0 : i32
    return %c0_i32, %c0_i32_0, %c0_i32_1 : i32, i32, i32
  }
  func.func @transform_3(%arg0: i32) -> (i32, i32, i32) {
    %c0_i32 = arith.constant 0 : i32
    %c0_i32_0 = arith.constant 0 : i32
    %c0_i32_1 = arith.constant 0 : i32
    %c0_i32_2 = arith.constant 0 : i32
    return %c0_i32, %c0_i32_0, %c0_i32_1 : i32, i32, i32
  }
  func.func @transform_4(%arg0: i32) -> (i32, i32, i32) {
    %c0_i32 = arith.constant 0 : i32
    %c0_i32_0 = arith.constant 0 : i32
    %c0_i32_1 = arith.constant 0 : i32
    %c0_i32_2 = arith.constant 0 : i32
    return %c0_i32, %c0_i32_0, %c0_i32_1 : i32, i32, i32
  }
  func.func @transform_5(%arg0: i32) -> (i32, i32, i32) {
    %c0_i32 = arith.constant 0 : i32
    %c0_i32_0 = arith.constant 0 : i32
    %c0_i32_1 = arith.constant 0 : i32
    %c0_i32_2 = arith.constant 0 : i32
    return %c0_i32, %c0_i32_0, %c0_i32_1 : i32, i32, i32
  }
  func.func @transform_6(%arg0: i32) -> (i32, i32, i32) {
    %c0_i32 = arith.constant 0 : i32
    %c0_i32_0 = arith.constant 0 : i32
    %c0_i32_1 = arith.constant 0 : i32
    %c0_i32_2 = arith.constant 0 : i32
    return %c0_i32, %c0_i32_0, %c0_i32_1 : i32, i32, i32
  }
  func.func @transform_7(%arg0: i32) -> (i32, i32, i32) {
    %c0_i32 = arith.constant 0 : i32
    %c0_i32_0 = arith.constant 0 : i32
    %c0_i32_1 = arith.constant 0 : i32
    %c0_i32_2 = arith.constant 0 : i32
    return %c0_i32, %c0_i32_0, %c0_i32_1 : i32, i32, i32
  }
  func.func @transform_8(%arg0: i32) -> (i32, i32, i32) {
    %c0_i32 = arith.constant 0 : i32
    %c0_i32_0 = arith.constant 0 : i32
    %c0_i32_1 = arith.constant 0 : i32
    %c0_i32_2 = arith.constant 0 : i32
    return %c0_i32, %c0_i32_0, %c0_i32_1 : i32, i32, i32
  }
  func.func @transform_9(%arg0: i32) -> (i32, i32, i32) {
    %c0_i32 = arith.constant 0 : i32
    %c0_i32_0 = arith.constant 0 : i32
    %c0_i32_1 = arith.constant 0 : i32
    %c0_i32_2 = arith.constant 0 : i32
    return %c0_i32, %c0_i32_0, %c0_i32_1 : i32, i32, i32
  }
  func.func @transform_10(%arg0: i32) -> (i32, i32) {
    %c0_i32 = arith.constant 0 : i32
    %c0_i32_0 = arith.constant 0 : i32
    %c0_i32_1 = arith.constant 0 : i32
    return %c0_i32, %c0_i32_0 : i32, i32
  }
  func.func @transform_11(%arg0: i32) -> (i32, i32) {
    %c0_i32 = arith.constant 0 : i32
    %c0_i32_0 = arith.constant 0 : i32
    %c0_i32_1 = arith.constant 0 : i32
    return %c0_i32, %c0_i32_0 : i32, i32
  }
  func.func @transform_12(%arg0: i32) -> (i32, i32) {
    %c0_i32 = arith.constant 0 : i32
    %c0_i32_0 = arith.constant 0 : i32
    %c0_i32_1 = arith.constant 0 : i32
    return %c0_i32, %c0_i32_0 : i32, i32
  }
  func.func @transform_13(%arg0: i32) -> (i32, i32) {
    %c0_i32 = arith.constant 0 : i32
    %c0_i32_0 = arith.constant 0 : i32
    %c0_i32_1 = arith.constant 0 : i32
    return %c0_i32, %c0_i32_0 : i32, i32
  }
  func.func @transform_14(%arg0: i32) -> (i32, i32) {
    %c0_i32 = arith.constant 0 : i32
    %c0_i32_0 = arith.constant 0 : i32
    %c0_i32_1 = arith.constant 0 : i32
    return %c0_i32, %c0_i32_0 : i32, i32
  }
  func.func @transform_15(%arg0: i32) -> (i32, i32, i32) {
    %c0_i32 = arith.constant 0 : i32
    %c0_i32_0 = arith.constant 0 : i32
    %c0_i32_1 = arith.constant 0 : i32
    %c0_i32_2 = arith.constant 0 : i32
    return %c0_i32, %c0_i32_0, %c0_i32_1 : i32, i32, i32
  }
}

</mosaic_0001>

<llo_original>
// kernel: decoder_forward.3
$region0: #{decoder_forward.3}
  #allocation0 [shape = 'u32[]', space=smem, size = 0x4, offset = 0x4, fixed_abs, tag = 'smem constant byte address 0x4 - core index']
  #allocation1 [shape = 'u32[144,128]{1,0:T(1,128)}', space=vmem, size = 0x12000, scoped, tag = 'internal scratch']
  %s0 = inlined_call_operand.vmem [shape: bf16[8,256], index: 0, kind: input, shape index: {}]
  %s1 = inlined_call_operand.vmem [shape: bf16[256,1024], index: 1, kind: input, shape index: {}]
  %s2 = inlined_call_operand.vmem [shape: f32[1,1024], index: 2, kind: input, shape index: {}]
  %s3 = inlined_call_operand.hbm [shape: f32[8,1024], index: 3, kind: output, shape index: {}]
  %s4 = sld [smem:[#allocation0]]
  $region68: #{decoder_forward.3} parent=0
    _
  %s6 = ssub.s32 1, %s4
  %s7 = scalar_select 0, %s6, %s4
  $region1: #{decoder_forward.3} parent=0
    #allocation2 [shape = 'u8[524288]{0}', space=vmem, size = 0x80000, scoped, tag = 'input window, operand 1']
    #allocation3 [shape = 'u8[32768]{0}', space=vmem, size = 0x8000, scoped, tag = 'output window, operand 0']
    #allocation4 [shape = 's32[2]{0}', space=sflag, size = 0x8, scoped, tag = 'scoped memory for decoder_forward.3']
    %8 = vsyncpa [#allocation4], 0
    %s9 = scalar_lea.sflag [#allocation4], 1
    %10 = vsyncpa %s9, 0
    loop: start=0, step=1, limit=4
    $region2: #{decoder_forward.3} parent=1 // loop_pre_header
      _
    $region3: #{decoder_forward.3} parent=1 // loop_header
      %s12 = sphi 0, %s16
      %p13 = scmp.ge.s32.totalorder %s12, 4
      %s20 = sphi 0, %s20
      %s22 = sphi 0, %s20
      %s23 = sphi 0, %s22
      %s37 = sphi 0, %s23
      %s43 = sphi 0, %s45
      %s46 = sphi 0, %s43
      %s47 = sphi 0, %s46
      %s63 = sphi 0, %s47
      %s69 = sphi 0, %s71
      %s72 = sphi 0, %s69
      %s73 = sphi 0, %s72
      %s89 = sphi 0, %s73
      %s95 = sphi 0, %s97
      %s98 = sphi 0, %s95
      %s99 = sphi 0, %s98
      %s115 = sphi 0, %s99
    $region4: #{decoder_forward.3} parent=1 // loop_header_branch
      %15 = sbr.rel (%p13) target = $region8
    $region5: #{decoder_forward.3} parent=1 // loop_body
      %s17 = ssub.s32 %s12, 1
      %s18 = ssub.s32 %s12, 2
      %s19 = sadd.s32 %s12, 1
      %s21 = sadd.s32 %s20, 1
      %p24 = scmp.eq.s32.totalorder %s12, 1
      %p25 = scmp.ne.s32.totalorder %s20, %s22
      %p26 = scmp.eq.s32.totalorder %s12, 0
      %p27 = por %p25, %p26
      %p28 = scmp.ne.s32.totalorder %s20, %s22
      %p29 = scmp.eq.s32.totalorder %s17, 1
      %p30 = por %p28, %p29
      %p31 = scmp.ne.s32.totalorder %s22, %s23
      %p32 = scmp.eq.s32.totalorder %s17, 0
      %p33 = por %p31, %p32
      %p34 = scmp.ne.s32.totalorder %s22, %s23
      %p35 = scmp.eq.s32.totalorder %s18, 1
      %p36 = por %p34, %p35
      %p38 = scmp.ne.s32.totalorder %s23, %s37
      %p39 = scmp.eq.s32.totalorder %s18, 0
      %p40 = por %p38, %p39
      %s41 = ssub.s32 %s12, %s19
      %p42 = scmp.eq.s32.totalorder %s41, 0
      %s44 = sadd.s32 %s43, 1
      %s45 = scalar_select %p42, %s43, %s44
      %p48 = pneg %p42
      %p49 = scmp.eq.s32.totalorder %s12, 1
      %p50 = por %p48, %p49
      %p51 = scmp.ne.s32.totalorder %s43, %s46
      %p52 = scmp.eq.s32.totalorder %s12, 0
      %p53 = por %p51, %p52
      %p54 = scmp.ne.s32.totalorder %s43, %s46
      %p55 = scmp.eq.s32.totalorder %s17, 1
      %p56 = por %p54, %p55
      %p57 = scmp.ne.s32.totalorder %s46, %s47
      %p58 = scmp.eq.s32.totalorder %s17, 0
      %p59 = por %p57, %p58
      %p60 = scmp.ne.s32.totalorder %s46, %s47
      %p61 = scmp.eq.s32.totalorder %s18, 1
      %p62 = por %p60, %p61
      %p64 = scmp.ne.s32.totalorder %s47, %s63
      %p65 = scmp.eq.s32.totalorder %s18, 0
      %p66 = por %p64, %p65
      %s67 = ssub.s32 %s12, %s19
      %p68 = scmp.eq.s32.totalorder %s67, 0
      %s70 = sadd.s32 %s69, 1
      %s71 = scalar_select %p68, %s69, %s70
      %p74 = pneg %p68
      %p75 = scmp.eq.s32.totalorder %s12, 1
      %p76 = por %p74, %p75
      %p77 = scmp.ne.s32.totalorder %s69, %s72
      %p78 = scmp.eq.s32.totalorder %s12, 0
      %p79 = por %p77, %p78
      %p80 = scmp.ne.s32.totalorder %s69, %s72
      %p81 = scmp.eq.s32.totalorder %s17, 1
      %p82 = por %p80, %p81
      %p83 = scmp.ne.s32.totalorder %s72, %s73
      %p84 = scmp.eq.s32.totalorder %s17, 0
      %p85 = por %p83, %p84
      %p86 = scmp.ne.s32.totalorder %s72, %s73
      %p87 = scmp.eq.s32.totalorder %s18, 1
      %p88 = por %p86, %p87
      %p90 = scmp.ne.s32.totalorder %s73, %s89
      %p91 = scmp.eq.s32.totalorder %s18, 0
      %p92 = por %p90, %p91
      %s93 = ssub.s32 %s12, %s19
      %p94 = scmp.eq.s32.totalorder %s93, 0
      %s96 = sadd.s32 %s95, 1
      %s97 = scalar_select %p94, %s95, %s96
      %p100 = pneg %p94
      %p101 = scmp.eq.s32.totalorder %s12, 1
      %p102 = por %p100, %p101
      %p103 = scmp.ne.s32.totalorder %s95, %s98
      %p104 = scmp.eq.s32.totalorder %s12, 0
      %p105 = por %p103, %p104
      %p106 = scmp.ne.s32.totalorder %s95, %s98
      %p107 = scmp.eq.s32.totalorder %s17, 1
      %p108 = por %p106, %p107
      %p109 = scmp.ne.s32.totalorder %s98, %s99
      %p110 = scmp.eq.s32.totalorder %s17, 0
      %p111 = por %p109, %p110
      %p112 = scmp.ne.s32.totalorder %s98, %s99
      %p113 = scmp.eq.s32.totalorder %s18, 1
      %p114 = por %p112, %p113
      %p116 = scmp.ne.s32.totalorder %s99, %s115
      %p117 = scmp.eq.s32.totalorder %s18, 0
      %p118 = por %p116, %p117
      %p119 = scmp.le.s32.totalorder 1, %s12
      %p120 = scmp.lt.s32.totalorder %s12, 3
      %p121 = pnand %p119, %p120
      %p122 = pneg %p121
      // Predicated region
      $region9: #{decoder_forward.3} parent=5 // pred_check
        _
      $region10: #{decoder_forward.3} parent=5 // pred_check_branch
        %124 = sbr.rel (%p121) target = $region12
      $region11: #{decoder_forward.3} parent=5 // pred_region
        %s125 = ssub.s32 %s12, 1
        // Predicated region
        $region13: #{decoder_forward.3} parent=11 // pred_check
          %p126 = pneg %p33
        $region14: #{decoder_forward.3} parent=11 // pred_check_branch
          %128 = sbr.rel (%p126) target = $region16
        $region15: #{decoder_forward.3} parent=11 // pred_region
          _
        $region16: #{decoder_forward.3} parent=11 // pred_fallthru
          _
      $region12: #{decoder_forward.3} parent=5 // pred_fallthru
        _
      %p129 = scmp.lt.s32.totalorder %s12, 2
      // Predicated region
      $region17: #{decoder_forward.3} parent=5 // pred_check
        %p130 = pneg %p129
      $region18: #{decoder_forward.3} parent=5 // pred_check_branch
        %132 = sbr.rel (%p130) target = $region20
      $region19: #{decoder_forward.3} parent=5 // pred_region
        // Predicated region
        $region21: #{decoder_forward.3} parent=19 // pred_check
          %p133 = pneg %p53
        $region22: #{decoder_forward.3} parent=19 // pred_check_branch
          %135 = sbr.rel (%p133) target = $region24
        $region23: #{decoder_forward.3} parent=19 // pred_region
          %s136 = sand.u32 %s43, 1
          %s137 = sand.u32 %s43, 1
          %s138 = smul.addr %s137, 512
          %s139 = scalar_lea.vmem [#allocation2], %s138
          %s140 = smul.u32 4, %s12
          %s141 = smul.addr %s140, 4
          %s142 = scalar_lea.vmem %s1, %s141
          // Predicated region
          $region25: #{decoder_forward.3} parent=23 // pred_check
            _
          $region26: #{decoder_forward.3} parent=23 // pred_check_branch
            %144 = sbr.rel (0) target = $region28
          $region27: #{decoder_forward.3} parent=23 // pred_region
            // Predicated region
            $region29: #{decoder_forward.3} parent=27 // pred_check
              _
            $region30: #{decoder_forward.3} parent=27 // pred_check_branch
              %146 = sbr.rel (0) target = $region32
            $region31: #{decoder_forward.3} parent=27 // pred_region
              loop: start=0, step=1, limit=1
              $region33: #{decoder_forward.3} parent=31 // loop_pre_header
                _
              $region34: #{decoder_forward.3} parent=31 // loop_header
                %s148 = sphi 0, %s152
                %p149 = scmp.ge.s32.totalorder %s148, 1
                %s153 = sphi %s142, %s142
                %s154 = sphi %s139, %s139
              $region35: #{decoder_forward.3} parent=31 // loop_header_branch
                %151 = sbr.rel (%p149) target = $region39
              $region36: #{decoder_forward.3} parent=31 // loop_body
                %v155 = vld [vmem:[%s153] sm:$0xff]
                %156 = vst [vmem:[%s154] sm:$0xff] %v155
                %v157 = vld [vmem:[%s153 + $0x8] sm:$0xff]
                %158 = vst [vmem:[%s154 + $0x8] sm:$0xff] %v157
                %v159 = vld [vmem:[%s153 + $0x20] sm:$0xff]
                %160 = vst [vmem:[%s154 + $0x10] sm:$0xff] %v159
                %v161 = vld [vmem:[%s153 + $0x28] sm:$0xff]
                %162 = vst [vmem:[%s154 + $0x18] sm:$0xff] %v161
                %v163 = vld [vmem:[%s153 + $0x40] sm:$0xff]
                %164 = vst [vmem:[%s154 + $0x20] sm:$0xff] %v163
                %v165 = vld [vmem:[%s153 + $0x48] sm:$0xff]
                %166 = vst [vmem:[%s154 + $0x28] sm:$0xff] %v165
                %v167 = vld [vmem:[%s153 + $0x60] sm:$0xff]
                %168 = vst [vmem:[%s154 + $0x30] sm:$0xff] %v167
                %v169 = vld [vmem:[%s153 + $0x68] sm:$0xff]
                %170 = vst [vmem:[%s154 + $0x38] sm:$0xff] %v169
                %v171 = vld [vmem:[%s153 + $0x80] sm:$0xff]
                %172 = vst [vmem:[%s154 + $0x40] sm:$0xff] %v171
                %v173 = vld [vmem:[%s153 + $0x88] sm:$0xff]
                %174 = vst [vmem:[%s154 + $0x48] sm:$0xff] %v173
                %v175 = vld [vmem:[%s153 + $0xa0] sm:$0xff]
                %176 = vst [vmem:[%s154 + $0x50] sm:$0xff] %v175
                %v177 = vld [vmem:[%s153 + $0xa8] sm:$0xff]
                %178 = vst [vmem:[%s154 + $0x58] sm:$0xff] %v177
                %v179 = vld [vmem:[%s153 + $0xc0] sm:$0xff]
                %180 = vst [vmem:[%s154 + $0x60] sm:$0xff] %v179
                %v181 = vld [vmem:[%s153 + $0xc8] sm:$0xff]
                %182 = vst [vmem:[%s154 + $0x68] sm:$0xff] %v181
                %v183 = vld [vmem:[%s153 + $0xe0] sm:$0xff]
                %184 = vst [vmem:[%s154 + $0x70] sm:$0xff] %v183
                %v185 = vld [vmem:[%s153 + $0xe8] sm:$0xff]
                %186 = vst [vmem:[%s154 + $0x78] sm:$0xff] %v185
                %v187 = vld [vmem:[%s153 + $0x100] sm:$0xff]
                %188 = vst [vmem:[%s154 + $0x80] sm:$0xff] %v187
                %v189 = vld [vmem:[%s153 + $0x108] sm:$0xff]
                %190 = vst [vmem:[%s154 + $0x88] sm:$0xff] %v189
                %v191 = vld [vmem:[%s153 + $0x120] sm:$0xff]
                %192 = vst [vmem:[%s154 + $0x90] sm:$0xff] %v191
                %v193 = vld [vmem:[%s153 + $0x128] sm:$0xff]
                %194 = vst [vmem:[%s154 + $0x98] sm:$0xff] %v193
                %v195 = vld [vmem:[%s153 + $0x140] sm:$0xff]
                %196 = vst [vmem:[%s154 + $0xa0] sm:$0xff] %v195
                %v197 = vld [vmem:[%s153 + $0x148] sm:$0xff]
                %198 = vst [vmem:[%s154 + $0xa8] sm:$0xff] %v197
                %v199 = vld [vmem:[%s153 + $0x160] sm:$0xff]
                %200 = vst [vmem:[%s154 + $0xb0] sm:$0xff] %v199
                %v201 = vld [vmem:[%s153 + $0x168] sm:$0xff]
                %202 = vst [vmem:[%s154 + $0xb8] sm:$0xff] %v201
                %v203 = vld [vmem:[%s153 + $0x180] sm:$0xff]
                %204 = vst [vmem:[%s154 + $0xc0] sm:$0xff] %v203
                %v205 = vld [vmem:[%s153 + $0x188] sm:$0xff]
                %206 = vst [vmem:[%s154 + $0xc8] sm:$0xff] %v205
                %v207 = vld [vmem:[%s153 + $0x1a0] sm:$0xff]
                %208 = vst [vmem:[%s154 + $0xd0] sm:$0xff] %v207
                %v209 = vld [vmem:[%s153 + $0x1a8] sm:$0xff]
                %210 = vst [vmem:[%s154 + $0xd8] sm:$0xff] %v209
                %v211 = vld [vmem:[%s153 + $0x1c0] sm:$0xff]
                %212 = vst [vmem:[%s154 + $0xe0] sm:$0xff] %v211
                %v213 = vld [vmem:[%s153 + $0x1c8] sm:$0xff]
                %214 = vst [vmem:[%s154 + $0xe8] sm:$0xff] %v213
                %v215 = vld [vmem:[%s153 + $0x1e0] sm:$0xff]
                %216 = vst [vmem:[%s154 + $0xf0] sm:$0xff] %v215
                %v217 = vld [vmem:[%s153 + $0x1e8] sm:$0xff]
                %218 = vst [vmem:[%s154 + $0xf8] sm:$0xff] %v217
                %v219 = vld [vmem:[%s153 + $0x200] sm:$0xff]
                %220 = vst [vmem:[%s154 + $0x100] sm:$0xff] %v219
                %v221 = vld [vmem:[%s153 + $0x208] sm:$0xff]
                %222 = vst [vmem:[%s154 + $0x108] sm:$0xff] %v221
                %v223 = vld [vmem:[%s153 + $0x220] sm:$0xff]
                %224 = vst [vmem:[%s154 + $0x110] sm:$0xff] %v223
                %v225 = vld [vmem:[%s153 + $0x228] sm:$0xff]
                %226 = vst [vmem:[%s154 + $0x118] sm:$0xff] %v225
                %v227 = vld [vmem:[%s153 + $0x240] sm:$0xff]
                %228 = vst [vmem:[%s154 + $0x120] sm:$0xff] %v227
                %v229 = vld [vmem:[%s153 + $0x248] sm:$0xff]
                %230 = vst [vmem:[%s154 + $0x128] sm:$0xff] %v229
                %v231 = vld [vmem:[%s153 + $0x260] sm:$0xff]
                %232 = vst [vmem:[%s154 + $0x130] sm:$0xff] %v231
                %v233 = vld [vmem:[%s153 + $0x268] sm:$0xff]
                %234 = vst [vmem:[%s154 + $0x138] sm:$0xff] %v233
                %v235 = vld [vmem:[%s153 + $0x280] sm:$0xff]
                %236 = vst [vmem:[%s154 + $0x140] sm:$0xff] %v235
                %v237 = vld [vmem:[%s153 + $0x288] sm:$0xff]
                %238 = vst [vmem:[%s154 + $0x148] sm:$0xff] %v237
                %v239 = vld [vmem:[%s153 + $0x2a0] sm:$0xff]
                %240 = vst [vmem:[%s154 + $0x150] sm:$0xff] %v239
                %v241 = vld [vmem:[%s153 + $0x2a8] sm:$0xff]
                %242 = vst [vmem:[%s154 + $0x158] sm:$0xff] %v241
                %v243 = vld [vmem:[%s153 + $0x2c0] sm:$0xff]
                %244 = vst [vmem:[%s154 + $0x160] sm:$0xff] %v243
                %v245 = vld [vmem:[%s153 + $0x2c8] sm:$0xff]
                %246 = vst [vmem:[%s154 + $0x168] sm:$0xff] %v245
                %v247 = vld [vmem:[%s153 + $0x2e0] sm:$0xff]
                %248 = vst [vmem:[%s154 + $0x170] sm:$0xff] %v247
                %v249 = vld [vmem:[%s153 + $0x2e8] sm:$0xff]
                %250 = vst [vmem:[%s154 + $0x178] sm:$0xff] %v249
                %v251 = vld [vmem:[%s153 + $0x300] sm:$0xff]
                %252 = vst [vmem:[%s154 + $0x180] sm:$0xff] %v251
                %v253 = vld [vmem:[%s153 + $0x308] sm:$0xff]
                %254 = vst [vmem:[%s154 + $0x188] sm:$0xff] %v253
                %v255 = vld [vmem:[%s153 + $0x320] sm:$0xff]
                %256 = vst [vmem:[%s154 + $0x190] sm:$0xff] %v255
                %v257 = vld [vmem:[%s153 + $0x328] sm:$0xff]
                %258 = vst [vmem:[%s154 + $0x198] sm:$0xff] %v257
                %v259 = vld [vmem:[%s153 + $0x340] sm:$0xff]
                %260 = vst [vmem:[%s154 + $0x1a0] sm:$0xff] %v259
                %v261 = vld [vmem:[%s153 + $0x348] sm:$0xff]
                %262 = vst [vmem:[%s154 + $0x1a8] sm:$0xff] %v261
                %v263 = vld [vmem:[%s153 + $0x360] sm:$0xff]
                %264 = vst [vmem:[%s154 + $0x1b0] sm:$0xff] %v263
                %v265 = vld [vmem:[%s153 + $0x368] sm:$0xff]
                %266 = vst [vmem:[%s154 + $0x1b8] sm:$0xff] %v265
                %v267 = vld [vmem:[%s153 + $0x380] sm:$0xff]
                %268 = vst [vmem:[%s154 + $0x1c0] sm:$0xff] %v267
                %v269 = vld [vmem:[%s153 + $0x388] sm:$0xff]
                %270 = vst [vmem:[%s154 + $0x1c8] sm:$0xff] %v269
                %v271 = vld [vmem:[%s153 + $0x3a0] sm:$0xff]
                %272 = vst [vmem:[%s154 + $0x1d0] sm:$0xff] %v271
                %v273 = vld [vmem:[%s153 + $0x3a8] sm:$0xff]
                %274 = vst [vmem:[%s154 + $0x1d8] sm:$0xff] %v273
                %v275 = vld [vmem:[%s153 + $0x3c0] sm:$0xff]
                %276 = vst [vmem:[%s154 + $0x1e0] sm:$0xff] %v275
                %v277 = vld [vmem:[%s153 + $0x3c8] sm:$0xff]
                %278 = vst [vmem:[%s154 + $0x1e8] sm:$0xff] %v277
                %v279 = vld [vmem:[%s153 + $0x3e0] sm:$0xff]
                %280 = vst [vmem:[%s154 + $0x1f0] sm:$0xff] %v279
                %v281 = vld [vmem:[%s153 + $0x3e8] sm:$0xff]
                %282 = vst [vmem:[%s154 + $0x1f8] sm:$0xff] %v281
              $region37: #{decoder_forward.3} parent=31 // loop_footer
                %s152 = sadd.s32 1, %s148
              $region38: #{decoder_forward.3} parent=31 // loop_footer_branch
                %147 = sbr.rel target = $region34
              $region39: #{decoder_forward.3} parent=31 // loop_exit
                _
            $region32: #{decoder_forward.3} parent=27 // pred_fallthru
              _
            // Predicated region
            $region40: #{decoder_forward.3} parent=27 // pred_check
              _
            $region41: #{decoder_forward.3} parent=27 // pred_check_branch
              %284 = sbr.rel target = $region43
            $region42: #{decoder_forward.3} parent=27 // pred_region
              _
            $region43: #{decoder_forward.3} parent=27 // pred_fallthru
              _
          $region28: #{decoder_forward.3} parent=23 // pred_fallthru
            _
          %285 = vnop
        $region24: #{decoder_forward.3} parent=19 // pred_fallthru
          _
        // Predicated region
        $region44: #{decoder_forward.3} parent=19 // pred_check
          %p286 = pneg %p79
        $region45: #{decoder_forward.3} parent=19 // pred_check_branch
          %288 = sbr.rel (%p286) target = $region47
        $region46: #{decoder_forward.3} parent=19 // pred_region
          %s289 = smul.u32 4, %s12
          %p290 = scmp.lt.s32.totalorder %s289, 7
          %s291 = scalar_select %p290, %s289, 7
          %s292 = scalar_lea.vmem %s2, %s291
          %s293 = smul.u32 4, %s12
        $region47: #{decoder_forward.3} parent=19 // pred_fallthru
          _
      $region20: #{decoder_forward.3} parent=5 // pred_fallthru
        _
      %p294 = scmp.le.s32.totalorder 1, %s12
      %p295 = scmp.lt.s32.totalorder %s12, 3
      %p296 = pnand %p294, %p295
      %p297 = pneg %p296
      // Predicated region
      $region48: #{decoder_forward.3} parent=5 // pred_check
        _
      $region49: #{decoder_forward.3} parent=5 // pred_check_branch
        %299 = sbr.rel (%p296) target = $region51
      $region50: #{decoder_forward.3} parent=5 // pred_region
        %s300 = ssub.s32 %s12, 1
        %s301 = sand.u32 %s46, 1
        %s302 = sand.u32 %s46, 1
        %s303 = smul.addr %s302, 512
        %s304 = scalar_lea.vmem [#allocation2], %s303
        // Predicated region
        $region52: #{decoder_forward.3} parent=50 // pred_check
          %p305 = pneg %p59
        $region53: #{decoder_forward.3} parent=50 // pred_check_branch
          %307 = sbr.rel (%p305) target = $region55
        $region54: #{decoder_forward.3} parent=50 // pred_region
          _
        $region55: #{decoder_forward.3} parent=50 // pred_fallthru
          _
        %p308 = pneg %p33
        %p309 = pneg %p30
        %s310 = sand.u32 %s46, 1
        %s311 = sand.u32 %s46, 1
        %s312 = smul.addr %s311, 512
        %s313 = scalar_lea.vmem [#allocation2], %s312
        %p314 = pneg %p59
        %p315 = pneg %p56
        %s316 = smul.u32 4, %s17
        %p317 = scmp.lt.s32.totalorder %s316, 7
        %s318 = scalar_select %p317, %s316, 7
        %s319 = scalar_lea.vmem %s2, %s318
        %p320 = pneg %p85
        %p321 = pneg %p82
        %p322 = pneg %p111
        %p323 = pneg %p108
        %s324 = sand.u32 %s98, 1
        %s325 = scalar_lea.sflag [#allocation4], %s324
        %s326 = sand.u32 %s98, 1
        %s327 = smul.addr %s326, 32
        %s328 = scalar_lea.vmem [#allocation3], %s327
        %s329 = smul.u32 4, %s17
        %s330 = smul.u32 4, %s17
        %p331 = scmp.lt.s32.totalorder %s330, 7
        %s332 = scalar_select %p331, %s330, 7
        %s333 = scalar_lea.vmem %s2, %s332
        %s334 = smul.u32 4, %s17
        %s335 = smul.u32 4, %s17
        %v336 = vld [vmem:[%s0] sm:$0xff]
        %v337 = vld [vmem:[%s304] sm:$0xff]
        %v338 = vld [vmem:[%s304 + $0x8] sm:$0xff]
        %v339 = vld [vmem:[%s304 + $0x10] sm:$0xff]
        %v340 = vld [vmem:[%s304 + $0x18] sm:$0xff]
        %v341 = vld [vmem:[%s304 + $0x20] sm:$0xff]
        %v342 = vld [vmem:[%s304 + $0x28] sm:$0xff]
        %v343 = vld [vmem:[%s304 + $0x30] sm:$0xff]
        %v344 = vld [vmem:[%s304 + $0x38] sm:$0xff]
        %v345 = vld [vmem:[%s304 + $0x40] sm:$0xff]
        %v346 = vld [vmem:[%s304 + $0x48] sm:$0xff]
        %v347 = vld [vmem:[%s304 + $0x50] sm:$0xff]
        %v348 = vld [vmem:[%s304 + $0x58] sm:$0xff]
        %v349 = vld [vmem:[%s304 + $0x60] sm:$0xff]
        %v350 = vld [vmem:[%s304 + $0x68] sm:$0xff]
        %v351 = vld [vmem:[%s304 + $0x70] sm:$0xff]
        %v352 = vld [vmem:[%s304 + $0x78] sm:$0xff]
        %v353 = vld [vmem:[%s304 + $0x80] sm:$0xff]
        %v354 = vld [vmem:[%s304 + $0x88] sm:$0xff]
        %v355 = vld [vmem:[%s304 + $0x90] sm:$0xff]
        %v356 = vld [vmem:[%s304 + $0x98] sm:$0xff]
        %v357 = vld [vmem:[%s304 + $0xa0] sm:$0xff]
        %v358 = vld [vmem:[%s304 + $0xa8] sm:$0xff]
        %v359 = vld [vmem:[%s304 + $0xb0] sm:$0xff]
        %v360 = vld [vmem:[%s304 + $0xb8] sm:$0xff]
        %v361 = vld [vmem:[%s304 + $0xc0] sm:$0xff]
        %v362 = vld [vmem:[%s304 + $0xc8] sm:$0xff]
        %v363 = vld [vmem:[%s304 + $0xd0] sm:$0xff]
        %v364 = vld [vmem:[%s304 + $0xd8] sm:$0xff]
        %v365 = vld [vmem:[%s304 + $0xe0] sm:$0xff]
        %v366 = vld [vmem:[%s304 + $0xe8] sm:$0xff]
        %v367 = vld [vmem:[%s304 + $0xf0] sm:$0xff]
        %v368 = vld [vmem:[%s304 + $0xf8] sm:$0xff]
        %v369 = vld [vmem:[%s304 + $0x100] sm:$0xff]
        %v370 = vld [vmem:[%s304 + $0x108] sm:$0xff]
        %v371 = vld [vmem:[%s304 + $0x110] sm:$0xff]
        %v372 = vld [vmem:[%s304 + $0x118] sm:$0xff]
        %v373 = vld [vmem:[%s304 + $0x120] sm:$0xff]
        %v374 = vld [vmem:[%s304 + $0x128] sm:$0xff]
        %v375 = vld [vmem:[%s304 + $0x130] sm:$0xff]
        %v376 = vld [vmem:[%s304 + $0x138] sm:$0xff]
        %v377 = vld [vmem:[%s304 + $0x140] sm:$0xff]
        %v378 = vld [vmem:[%s304 + $0x148] sm:$0xff]
        %v379 = vld [vmem:[%s304 + $0x150] sm:$0xff]
        %v380 = vld [vmem:[%s304 + $0x158] sm:$0xff]
        %v381 = vld [vmem:[%s304 + $0x160] sm:$0xff]
        %v382 = vld [vmem:[%s304 + $0x168] sm:$0xff]
        %v383 = vld [vmem:[%s304 + $0x170] sm:$0xff]
        %v384 = vld [vmem:[%s304 + $0x178] sm:$0xff]
        %v385 = vld [vmem:[%s304 + $0x180] sm:$0xff]
        %v386 = vld [vmem:[%s304 + $0x188] sm:$0xff]
        %v387 = vld [vmem:[%s304 + $0x190] sm:$0xff]
        %v388 = vld [vmem:[%s304 + $0x198] sm:$0xff]
        %v389 = vld [vmem:[%s304 + $0x1a0] sm:$0xff]
        %v390 = vld [vmem:[%s304 + $0x1a8] sm:$0xff]
        %v391 = vld [vmem:[%s304 + $0x1b0] sm:$0xff]
        %v392 = vld [vmem:[%s304 + $0x1b8] sm:$0xff]
        %v393 = vld [vmem:[%s304 + $0x1c0] sm:$0xff]
        %v394 = vld [vmem:[%s304 + $0x1c8] sm:$0xff]
        %v395 = vld [vmem:[%s304 + $0x1d0] sm:$0xff]
        %v396 = vld [vmem:[%s304 + $0x1d8] sm:$0xff]
        %v397 = vld [vmem:[%s304 + $0x1e0] sm:$0xff]
        %v398 = vld [vmem:[%s304 + $0x1e8] sm:$0xff]
        %v399 = vld [vmem:[%s304 + $0x1f0] sm:$0xff]
        %v400 = vld [vmem:[%s304 + $0x1f8] sm:$0xff]
        %v401 = vld [vmem:[%s333] sm:$0xf]
        %v403 = vlaneseq
        %v404 = vshrl.u32 %v403, 7
        %v405 = vsub.s32 0, %v404
        %v406 = vrot.slane %v401, %v405
        %v407 = vlaneseq
        %v408 = vshrl.u32 %v407, 7
        %v409 = vsub.s32 1, %v408
        %v410 = vrot.slane %v401, %v409
        %v411 = vlaneseq
        %v412 = vshrl.u32 %v411, 7
        %v413 = vsub.s32 2, %v412
        %v414 = vrot.slane %v401, %v413
        %v415 = vlaneseq
        %v416 = vshrl.u32 %v415, 7
        %v417 = vsub.s32 3, %v416
        %v418 = vrot.slane %v401, %v417
        %v424 = vunpack.c.l.b16 %v336
        %v425 = vunpack.c.h.b16 %v336
        %v426 = vpack.c.b16 %v424, %v424
        %v427 = vpack.c.b16 %v425, %v425
        %v494 = vunpack.c.l.b16 %v337
        %v495 = vunpack.c.h.b16 %v337
        %v496 = vunpack.c.l.b16 %v338
        %v497 = vunpack.c.h.b16 %v338
        %v498 = vunpack.c.l.b16 %v339
        %v499 = vunpack.c.h.b16 %v339
        %v500 = vunpack.c.l.b16 %v340
        %v501 = vunpack.c.h.b16 %v340
        %v502 = vunpack.c.l.b16 %v341
        %v503 = vunpack.c.h.b16 %v341
        %v504 = vunpack.c.l.b16 %v342
        %v505 = vunpack.c.h.b16 %v342
        %v506 = vunpack.c.l.b16 %v343
        %v507 = vunpack.c.h.b16 %v343
        %v508 = vunpack.c.l.b16 %v344
        %v509 = vunpack.c.h.b16 %v344
        %v510 = vunpack.c.l.b16 %v345
        %v511 = vunpack.c.h.b16 %v345
        %v512 = vunpack.c.l.b16 %v346
        %v513 = vunpack.c.h.b16 %v346
        %v514 = vunpack.c.l.b16 %v347
        %v515 = vunpack.c.h.b16 %v347
        %v516 = vunpack.c.l.b16 %v348
        %v517 = vunpack.c.h.b16 %v348
        %v518 = vunpack.c.l.b16 %v349
        %v519 = vunpack.c.h.b16 %v349
        %v520 = vunpack.c.l.b16 %v350
        %v521 = vunpack.c.h.b16 %v350
        %v522 = vunpack.c.l.b16 %v351
        %v523 = vunpack.c.h.b16 %v351
        %v524 = vunpack.c.l.b16 %v352
        %v525 = vunpack.c.h.b16 %v352
        %v526 = vunpack.c.l.b16 %v353
        %v527 = vunpack.c.h.b16 %v353
        %v528 = vunpack.c.l.b16 %v354
        %v529 = vunpack.c.h.b16 %v354
        %v530 = vunpack.c.l.b16 %v355
        %v531 = vunpack.c.h.b16 %v355
        %v532 = vunpack.c.l.b16 %v356
        %v533 = vunpack.c.h.b16 %v356
        %v534 = vunpack.c.l.b16 %v357
        %v535 = vunpack.c.h.b16 %v357
        %v536 = vunpack.c.l.b16 %v358
        %v537 = vunpack.c.h.b16 %v358
        %v538 = vunpack.c.l.b16 %v359
        %v539 = vunpack.c.h.b16 %v359
        %v540 = vunpack.c.l.b16 %v360
        %v541 = vunpack.c.h.b16 %v360
        %v542 = vunpack.c.l.b16 %v361
        %v543 = vunpack.c.h.b16 %v361
        %v544 = vunpack.c.l.b16 %v362
        %v545 = vunpack.c.h.b16 %v362
        %v546 = vunpack.c.l.b16 %v363
        %v547 = vunpack.c.h.b16 %v363
        %v548 = vunpack.c.l.b16 %v364
        %v549 = vunpack.c.h.b16 %v364
        %v550 = vunpack.c.l.b16 %v365
        %v551 = vunpack.c.h.b16 %v365
        %v552 = vunpack.c.l.b16 %v366
        %v553 = vunpack.c.h.b16 %v366
        %v554 = vunpack.c.l.b16 %v367
        %v555 = vunpack.c.h.b16 %v367
        %v556 = vunpack.c.l.b16 %v368
        %v557 = vunpack.c.h.b16 %v368
        %v558 = vunpack.c.l.b16 %v369
        %v559 = vunpack.c.h.b16 %v369
        %v560 = vunpack.c.l.b16 %v370
        %v561 = vunpack.c.h.b16 %v370
        %v562 = vunpack.c.l.b16 %v371
        %v563 = vunpack.c.h.b16 %v371
        %v564 = vunpack.c.l.b16 %v372
        %v565 = vunpack.c.h.b16 %v372
        %v566 = vunpack.c.l.b16 %v373
        %v567 = vunpack.c.h.b16 %v373
        %v568 = vunpack.c.l.b16 %v374
        %v569 = vunpack.c.h.b16 %v374
        %v570 = vunpack.c.l.b16 %v375
        %v571 = vunpack.c.h.b16 %v375
        %v572 = vunpack.c.l.b16 %v376
        %v573 = vunpack.c.h.b16 %v376
        %v574 = vunpack.c.l.b16 %v377
        %v575 = vunpack.c.h.b16 %v377
        %v576 = vunpack.c.l.b16 %v378
        %v577 = vunpack.c.h.b16 %v378
        %v578 = vunpack.c.l.b16 %v379
        %v579 = vunpack.c.h.b16 %v379
        %v580 = vunpack.c.l.b16 %v380
        %v581 = vunpack.c.h.b16 %v380
        %v582 = vunpack.c.l.b16 %v381
        %v583 = vunpack.c.h.b16 %v381
        %v584 = vunpack.c.l.b16 %v382
        %v585 = vunpack.c.h.b16 %v382
        %v586 = vunpack.c.l.b16 %v383
        %v587 = vunpack.c.h.b16 %v383
        %v588 = vunpack.c.l.b16 %v384
        %v589 = vunpack.c.h.b16 %v384
        %v590 = vunpack.c.l.b16 %v385
        %v591 = vunpack.c.h.b16 %v385
        %v592 = vunpack.c.l.b16 %v386
        %v593 = vunpack.c.h.b16 %v386
        %v594 = vunpack.c.l.b16 %v387
        %v595 = vunpack.c.h.b16 %v387
        %v596 = vunpack.c.l.b16 %v388
        %v597 = vunpack.c.h.b16 %v388
        %v598 = vunpack.c.l.b16 %v389
        %v599 = vunpack.c.h.b16 %v389
        %v600 = vunpack.c.l.b16 %v390
        %v601 = vunpack.c.h.b16 %v390
        %v602 = vunpack.c.l.b16 %v391
        %v603 = vunpack.c.h.b16 %v391
        %v604 = vunpack.c.l.b16 %v392
        %v605 = vunpack.c.h.b16 %v392
        %v606 = vunpack.c.l.b16 %v393
        %v607 = vunpack.c.h.b16 %v393
        %v608 = vunpack.c.l.b16 %v394
        %v609 = vunpack.c.h.b16 %v394
        %v610 = vunpack.c.l.b16 %v395
        %v611 = vunpack.c.h.b16 %v395
        %v612 = vunpack.c.l.b16 %v396
        %v613 = vunpack.c.h.b16 %v396
        %v614 = vunpack.c.l.b16 %v397
        %v615 = vunpack.c.h.b16 %v397
        %v616 = vunpack.c.l.b16 %v398
        %v617 = vunpack.c.h.b16 %v398
        %v618 = vunpack.c.l.b16 %v399
        %v619 = vunpack.c.h.b16 %v399
        %v620 = vunpack.c.l.b16 %v400
        %v621 = vunpack.c.h.b16 %v400
        %v622 = vpack.c.b16 %v498, %v494
        %v623 = vpack.c.b16 %v499, %v495
        %v624 = vpack.c.b16 %v500, %v496
        %v625 = vpack.c.b16 %v501, %v497
        %v626 = vpack.c.b16 %v506, %v502
        %v627 = vpack.c.b16 %v507, %v503
        %v628 = vpack.c.b16 %v508, %v504
        %v629 = vpack.c.b16 %v509, %v505
        %v630 = vpack.c.b16 %v514, %v510
        %v631 = vpack.c.b16 %v515, %v511
        %v632 = vpack.c.b16 %v516, %v512
        %v633 = vpack.c.b16 %v517, %v513
        %v634 = vpack.c.b16 %v522, %v518
        %v635 = vpack.c.b16 %v523, %v519
        %v636 = vpack.c.b16 %v524, %v520
        %v637 = vpack.c.b16 %v525, %v521
        %v638 = vpack.c.b16 %v530, %v526
        %v639 = vpack.c.b16 %v531, %v527
        %v640 = vpack.c.b16 %v532, %v528
        %v641 = vpack.c.b16 %v533, %v529
        %v642 = vpack.c.b16 %v538, %v534
        %v643 = vpack.c.b16 %v539, %v535
        %v644 = vpack.c.b16 %v540, %v536
        %v645 = vpack.c.b16 %v541, %v537
        %v646 = vpack.c.b16 %v546, %v542
        %v647 = vpack.c.b16 %v547, %v543
        %v648 = vpack.c.b16 %v548, %v544
        %v649 = vpack.c.b16 %v549, %v545
        %v650 = vpack.c.b16 %v554, %v550
        %v651 = vpack.c.b16 %v555, %v551
        %v652 = vpack.c.b16 %v556, %v552
        %v653 = vpack.c.b16 %v557, %v553
        %v654 = vpack.c.b16 %v562, %v558
        %v655 = vpack.c.b16 %v563, %v559
        %v656 = vpack.c.b16 %v564, %v560
        %v657 = vpack.c.b16 %v565, %v561
        %v658 = vpack.c.b16 %v570, %v566
        %v659 = vpack.c.b16 %v571, %v567
        %v660 = vpack.c.b16 %v572, %v568
        %v661 = vpack.c.b16 %v573, %v569
        %v662 = vpack.c.b16 %v578, %v574
        %v663 = vpack.c.b16 %v579, %v575
        %v664 = vpack.c.b16 %v580, %v576
        %v665 = vpack.c.b16 %v581, %v577
        %v666 = vpack.c.b16 %v586, %v582
        %v667 = vpack.c.b16 %v587, %v583
        %v668 = vpack.c.b16 %v588, %v584
        %v669 = vpack.c.b16 %v589, %v585
        %v670 = vpack.c.b16 %v594, %v590
        %v671 = vpack.c.b16 %v595, %v591
        %v672 = vpack.c.b16 %v596, %v592
        %v673 = vpack.c.b16 %v597, %v593
        %v674 = vpack.c.b16 %v602, %v598
        %v675 = vpack.c.b16 %v603, %v599
        %v676 = vpack.c.b16 %v604, %v600
        %v677 = vpack.c.b16 %v605, %v601
        %v678 = vpack.c.b16 %v610, %v606
        %v679 = vpack.c.b16 %v611, %v607
        %v680 = vpack.c.b16 %v612, %v608
        %v681 = vpack.c.b16 %v613, %v609
        %v682 = vpack.c.b16 %v618, %v614
        %v683 = vpack.c.b16 %v619, %v615
        %v684 = vpack.c.b16 %v620, %v616
        %v685 = vpack.c.b16 %v621, %v617
        %750 = vmatprep.subr.bf16.mxu0 %v651
        %751 = vmatpush1.bf16.msra.mxu0 %v650
        %752 = vmatprep.subr.bf16.mxu0 %v647
        %753 = vmatpush1.bf16.msra.mxu0 %v646
        %754 = vmatprep.subr.bf16.mxu0 %v643
        %755 = vmatpush1.bf16.msra.mxu0 %v642
        %756 = vmatprep.subr.bf16.mxu0 %v639
        %757 = vmatpush1.bf16.msra.mxu0 %v638
        %758 = vmatprep.subr.bf16.mxu0 %v635
        %759 = vmatpush1.bf16.msra.mxu0 %v634
        %760 = vmatprep.subr.bf16.mxu0 %v631
        %761 = vmatpush1.bf16.msra.mxu0 %v630
        %762 = vmatprep.subr.bf16.mxu0 %v627
        %763 = vmatpush1.bf16.msra.mxu0 %v626
        %764 = vmatprep.subr.bf16.mxu0 %v623
        %765 = vmatpush1.bf16.msra.mxu0 %v622
        %766 = vmatprep.subr.bf16.mxu0 %v683
        %767 = vmatpush2.bf16.msra.mxu0 %v682
        %768 = vmatprep.subr.bf16.mxu0 %v679
        %769 = vmatpush2.bf16.msra.mxu0 %v678
        %770 = vmatprep.subr.bf16.mxu0 %v675
        %771 = vmatpush2.bf16.msra.mxu0 %v674
        %772 = vmatprep.subr.bf16.mxu0 %v671
        %773 = vmatpush2.bf16.msra.mxu0 %v670
        %774 = vmatprep.subr.bf16.mxu0 %v667
        %775 = vmatpush2.bf16.msra.mxu0 %v666
        %776 = vmatprep.subr.bf16.mxu0 %v663
        %777 = vmatpush2.bf16.msra.mxu0 %v662
        %778 = vmatprep.subr.bf16.mxu0 %v659
        %779 = vmatpush2.bf16.msra.mxu0 %v658
        %780 = vmatprep.subr.bf16.mxu0 %v655
        %781 = vmatpush2.bf16.msra.mxu0 %v654
        %782 = vmatprep.mubr.bf16.mxu0 %v427
        %783 = vmatmul.mubr.bf16.gmra.mxu0 %v426
        %v784 = vpop.f32.mrf.mxu0
        %v785 = vadd.f32 %v406, %v784
        %v786 = vpop.f32.mrf.mxu0
        %v787 = vadd.f32 %v410, %v786
        %v788 = vpop.f32.mrf.mxu0
        %v789 = vpop.f32.mrf.mxu0
        %790 = vdwg.mxu0
        %791 = vmatprep.subr.bf16.mxu0 %v653
        %792 = vmatpush1.bf16.msra.mxu0 %v652
        %793 = vmatprep.subr.bf16.mxu0 %v649
        %794 = vmatpush1.bf16.msra.mxu0 %v648
        %795 = vmatprep.subr.bf16.mxu0 %v645
        %796 = vmatpush1.bf16.msra.mxu0 %v644
        %797 = vmatprep.subr.bf16.mxu0 %v641
        %798 = vmatpush1.bf16.msra.mxu0 %v640
        %799 = vmatprep.subr.bf16.mxu0 %v637
        %800 = vmatpush1.bf16.msra.mxu0 %v636
        %801 = vmatprep.subr.bf16.mxu0 %v633
        %802 = vmatpush1.bf16.msra.mxu0 %v632
        %803 = vmatprep.subr.bf16.mxu0 %v629
        %804 = vmatpush1.bf16.msra.mxu0 %v628
        %805 = vmatprep.subr.bf16.mxu0 %v625
        %806 = vmatpush1.bf16.msra.mxu0 %v624
        %807 = vmatprep.subr.bf16.mxu0 %v685
        %808 = vmatpush2.bf16.msra.mxu0 %v684
        %809 = vmatprep.subr.bf16.mxu0 %v681
        %810 = vmatpush2.bf16.msra.mxu0 %v680
        %811 = vmatprep.subr.bf16.mxu0 %v677
        %812 = vmatpush2.bf16.msra.mxu0 %v676
        %813 = vmatprep.subr.bf16.mxu0 %v673
        %814 = vmatpush2.bf16.msra.mxu0 %v672
        %815 = vmatprep.subr.bf16.mxu0 %v669
        %816 = vmatpush2.bf16.msra.mxu0 %v668
        %817 = vmatprep.subr.bf16.mxu0 %v665
        %818 = vmatpush2.bf16.msra.mxu0 %v664
        %819 = vmatprep.subr.bf16.mxu0 %v661
        %820 = vmatpush2.bf16.msra.mxu0 %v660
        %821 = vmatprep.subr.bf16.mxu0 %v657
        %822 = vmatpush2.bf16.msra.mxu0 %v656
        %823 = vmatprep.mubr.bf16.mxu0 %v427
        %824 = vmatmul.mubr.bf16.gmra.mxu0 %v426
        %v825 = vpop.f32.mrf.mxu0
        %v826 = vadd.f32 %v414, %v825
        %v827 = vpop.f32.mrf.mxu0
        %v828 = vadd.f32 %v418, %v827
        %v829 = vpop.f32.mrf.mxu0
        %v830 = vpop.f32.mrf.mxu0
        %831 = vdwg.mxu0
        %832 = vst [vmem:[%s328] sm:$0xff] %v785
        %833 = vst [vmem:[%s328 + $0x8] sm:$0xff] %v787
        %834 = vst [vmem:[%s328 + $0x10] sm:$0xff] %v826
        %835 = vst [vmem:[%s328 + $0x18] sm:$0xff] %v828
        %s836 = sand.u32 %s98, 1
        %s837 = scalar_lea.sflag [#allocation4], %s836
        %s838 = sand.u32 %s98, 1
        %s839 = smul.addr %s838, 32
        %s840 = scalar_lea.vmem [#allocation3], %s839
        // Predicated region
        $region56: #{decoder_forward.3} parent=50 // pred_check
          %p841 = pneg %p108
        $region57: #{decoder_forward.3} parent=50 // pred_check_branch
          %843 = sbr.rel (%p841) target = $region59
        $region58: #{decoder_forward.3} parent=50 // pred_region
          %s844 = smul.u32 4, %s17
          %s846 = ssub.s32 512, 512
          %847 = vsyncadd %s837, %s846
          %s848 = smul.addr %s844, 128
          %s849 = scalar_lea.hbm %s3, %s848
          %s851 = sshll.u32 %s840, 4
          %s852 = int_to_ptr.vmem [resolvable:$true] %s851
          %854 = dma.vmem_to_hbm [thread:$0]  %s852, 512, %s849, %s837
        $region59: #{decoder_forward.3} parent=50 // pred_fallthru
          _
      $region51: #{decoder_forward.3} parent=5 // pred_fallthru
        _
      %p855 = scmp.le.s32.totalorder 2, %s12
      // Predicated region
      $region60: #{decoder_forward.3} parent=5 // pred_check
        %p856 = pneg %p855
      $region61: #{decoder_forward.3} parent=5 // pred_check_branch
        %858 = sbr.rel (%p856) target = $region63
      $region62: #{decoder_forward.3} parent=5 // pred_region
        %s859 = ssub.s32 %s12, 2
        // Predicated region
        $region64: #{decoder_forward.3} parent=62 // pred_check
          %p860 = pneg %p114
        $region65: #{decoder_forward.3} parent=62 // pred_check_branch
          %862 = sbr.rel (%p860) target = $region67
        $region66: #{decoder_forward.3} parent=62 // pred_region
          %s863 = sand.u32 %s99, 1
          %s864 = scalar_lea.sflag [#allocation4], %s863
          %s865 = sand.u32 %s99, 1
          %s866 = smul.addr %s865, 32
          %s867 = scalar_lea.vmem [#allocation3], %s866
          %868 = dma.done %s864, 512
        $region67: #{decoder_forward.3} parent=62 // pred_fallthru
          _
      $region63: #{decoder_forward.3} parent=5 // pred_fallthru
        _
    $region6: #{decoder_forward.3} parent=1 // loop_footer
      %s16 = sadd.s32 1, %s12
    $region7: #{decoder_forward.3} parent=1 // loop_footer_branch
      %11 = sbr.rel target = $region3
    $region8: #{decoder_forward.3} parent=1 // loop_exit
      _
    %869 = vsyncpa [#allocation4], 1
    %s870 = scalar_lea.sflag [#allocation4], 1
    %871 = vsyncpa %s870, 1

// kernel: decoder_forward.2
$region0: #{decoder_forward.2}
  #allocation0 [shape = 'u32[]', space=smem, size = 0x4, offset = 0x4, fixed_abs, tag = 'smem constant byte address 0x4 - core index']
  #allocation1 [shape = 'u32[144,128]{1,0:T(1,128)}', space=vmem, size = 0x12000, scoped, tag = 'internal scratch']
  %s0 = inlined_call_operand.vmem [shape: f32[8,32], index: 0, kind: input, shape index: {}]
  %s1 = inlined_call_operand.vmem [shape: f32[2,8,64], index: 1, kind: input, shape index: {}, may-alias: {1,15}]
  %s2 = inlined_call_operand.vmem [shape: f32[3,32,64], index: 2, kind: input, shape index: {}]
  %s3 = inlined_call_operand.hbm [shape: f32[3,64,64], index: 3, kind: input, shape index: {}]
  %s4 = inlined_call_operand.vmem [shape: f32[3,1,64], index: 4, kind: input, shape index: {}]
  %s5 = inlined_call_operand.vmem [shape: f32[3,1,64], index: 5, kind: input, shape index: {}]
  %s6 = inlined_call_operand.hbm [shape: f32[3,64,64], index: 6, kind: input, shape index: {}]
  %s7 = inlined_call_operand.hbm [shape: f32[3,64,64], index: 7, kind: input, shape index: {}]
  %s8 = inlined_call_operand.hbm [shape: f32[3,1,64], index: 8, kind: input, shape index: {}]
  %s9 = inlined_call_operand.vmem [shape: f32[3,1,64], index: 9, kind: input, shape index: {}]
  %s10 = inlined_call_operand.hbm [shape: f32[64,128], index: 10, kind: input, shape index: {}]
  %s11 = inlined_call_operand.vmem [shape: f32[1,128], index: 11, kind: input, shape index: {}]
  %s12 = inlined_call_operand.vmem [shape: f32[128,256], index: 12, kind: input, shape index: {}]
  %s13 = inlined_call_operand.vmem [shape: f32[1,256], index: 13, kind: input, shape index: {}]
  %s14 = inlined_call_operand.vmem [shape: bf16[8,256], index: 14, kind: output, shape index: {0}]
  %s15 = inlined_call_operand.vmem [shape: f32[2,8,64], index: 15, kind: output, shape index: {1}, may-alias: {1,15}]
  %16 = xla_tuple %s14, %s15
  %s17 = sld [smem:[#allocation0]]
  $region94: #{decoder_forward.2} parent=0
    _
  %s19 = ssub.s32 1, %s17
  %s20 = scalar_select 0, %s19, %s17
  $region1: #{decoder_forward.2} parent=0
    #allocation2 [shape = 'u8[98304]{0}', space=vmem, size = 0x18000, scoped, tag = 'input window, operand 3, single buffered']
    #allocation3 [shape = 's32[1]{0}', space=sflag, size = 0x4, scoped, tag = 'scoped memory for decoder_forward.2']
    #allocation4 [shape = 'u8[98304]{0}', space=vmem, size = 0x18000, scoped, tag = 'input window, operand 6, single buffered']
    #allocation5 [shape = 's32[1]{0}', space=sflag, size = 0x4, scoped, tag = 'scoped memory for decoder_forward.2']
    #allocation6 [shape = 'u8[98304]{0}', space=vmem, size = 0x18000, scoped, tag = 'input window, operand 7, single buffered']
    #allocation7 [shape = 'u8[1536]{0}', space=vmem, size = 0x800, scoped, tag = 'input window, operand 8, single buffered']
    #allocation8 [shape = 's32[1]{0}', space=sflag, size = 0x4, scoped, tag = 'scoped memory for decoder_forward.2']
    #allocation9 [shape = 'u8[32768]{0}', space=vmem, size = 0x8000, scoped, tag = 'input window, operand 10, single buffered']
    %21 = vsyncpa [#allocation3], 0
    %22 = vsyncpa [#allocation5], 0
    %23 = vsyncpa [#allocation8], 0
    // Predicated region
    $region2: #{decoder_forward.2} parent=1 // pred_check
      _
    $region3: #{decoder_forward.2} parent=1 // pred_check_branch
      %25 = sbr.rel (0) target = $region5
    $region4: #{decoder_forward.2} parent=1 // pred_region
      _
    $region5: #{decoder_forward.2} parent=1 // pred_fallthru
      _
    // Predicated region
    $region6: #{decoder_forward.2} parent=1 // pred_check
      _
    $region7: #{decoder_forward.2} parent=1 // pred_check_branch
      %27 = sbr.rel (0) target = $region9
    $region8: #{decoder_forward.2} parent=1 // pred_region
      _
    $region9: #{decoder_forward.2} parent=1 // pred_fallthru
      _
    // Predicated region
    $region10: #{decoder_forward.2} parent=1 // pred_check
      _
    $region11: #{decoder_forward.2} parent=1 // pred_check_branch
      %29 = sbr.rel (0) target = $region13
    $region12: #{decoder_forward.2} parent=1 // pred_region
      _
    $region13: #{decoder_forward.2} parent=1 // pred_fallthru
      _
    // Predicated region
    $region14: #{decoder_forward.2} parent=1 // pred_check
      _
    $region15: #{decoder_forward.2} parent=1 // pred_check_branch
      %31 = sbr.rel (0) target = $region17
    $region16: #{decoder_forward.2} parent=1 // pred_region
      %s33 = ssub.s32 3072, 3072
      %34 = vsyncadd [#allocation3], %s33
      %s35 = sshll.u32 [#allocation2], 4
      %s36 = int_to_ptr.vmem [resolvable:$true] %s35
      %41 = dma.hbm_to_vmem [thread:$0]  %s3, 3072, %s36, [#allocation3], 128, 128, 8
    $region17: #{decoder_forward.2} parent=1 // pred_fallthru
      _
    // Predicated region
    $region18: #{decoder_forward.2} parent=1 // pred_check
      _
    $region19: #{decoder_forward.2} parent=1 // pred_check_branch
      %43 = sbr.rel (0) target = $region21
    $region20: #{decoder_forward.2} parent=1 // pred_region
      _
    $region21: #{decoder_forward.2} parent=1 // pred_fallthru
      _
    // Predicated region
    $region22: #{decoder_forward.2} parent=1 // pred_check
      _
    $region23: #{decoder_forward.2} parent=1 // pred_check_branch
      %45 = sbr.rel (0) target = $region25
    $region24: #{decoder_forward.2} parent=1 // pred_region
      _
    $region25: #{decoder_forward.2} parent=1 // pred_fallthru
      _
    // Predicated region
    $region26: #{decoder_forward.2} parent=1 // pred_check
      _
    $region27: #{decoder_forward.2} parent=1 // pred_check_branch
      %47 = sbr.rel (0) target = $region29
    $region28: #{decoder_forward.2} parent=1 // pred_region
      %s49 = ssub.s32 3072, 3072
      %50 = vsyncadd [#allocation5], %s49
      %s51 = sshll.u32 [#allocation4], 4
      %s52 = int_to_ptr.vmem [resolvable:$true] %s51
      %57 = dma.hbm_to_vmem [thread:$0]  %s6, 3072, %s52, [#allocation5], 128, 128, 8
    $region29: #{decoder_forward.2} parent=1 // pred_fallthru
      _
    // Predicated region
    $region30: #{decoder_forward.2} parent=1 // pred_check
      _
    $region31: #{decoder_forward.2} parent=1 // pred_check_branch
      %59 = sbr.rel (0) target = $region33
    $region32: #{decoder_forward.2} parent=1 // pred_region
      %s61 = ssub.s32 3072, 3072
      %62 = vsyncadd [#allocation5], %s61
      %s63 = sshll.u32 [#allocation6], 4
      %s64 = int_to_ptr.vmem [resolvable:$true] %s63
      %69 = dma.hbm_to_vmem [thread:$0]  %s7, 3072, %s64, [#allocation5], 128, 128, 8
    $region33: #{decoder_forward.2} parent=1 // pred_fallthru
      _
    // Predicated region
    $region34: #{decoder_forward.2} parent=1 // pred_check
      _
    $region35: #{decoder_forward.2} parent=1 // pred_check_branch
      %71 = sbr.rel (0) target = $region37
    $region36: #{decoder_forward.2} parent=1 // pred_region
      %s73 = ssub.s32 48, 48
      %74 = vsyncadd [#allocation8], %s73
      %s75 = sshll.u32 [#allocation7], 4
      %s76 = int_to_ptr.vmem [resolvable:$true] %s75
      %81 = dma.hbm_to_vmem [thread:$0]  %s8, 48, %s76, [#allocation8], 16, 16, 1
    $region37: #{decoder_forward.2} parent=1 // pred_fallthru
      _
    // Predicated region
    $region38: #{decoder_forward.2} parent=1 // pred_check
      _
    $region39: #{decoder_forward.2} parent=1 // pred_check_branch
      %83 = sbr.rel (0) target = $region41
    $region40: #{decoder_forward.2} parent=1 // pred_region
      _
    $region41: #{decoder_forward.2} parent=1 // pred_fallthru
      _
    // Predicated region
    $region42: #{decoder_forward.2} parent=1 // pred_check
      _
    $region43: #{decoder_forward.2} parent=1 // pred_check_branch
      %85 = sbr.rel (0) target = $region45
    $region44: #{decoder_forward.2} parent=1 // pred_region
      %s87 = ssub.s32 1024, 1024
      %88 = vsyncadd [#allocation8], %s87
      %s89 = sshll.u32 [#allocation9], 4
      %s90 = int_to_ptr.vmem [resolvable:$true] %s89
      %95 = dma.hbm_to_vmem [thread:$0]  %s10, 1024, %s90, [#allocation8], 128, 128, 8
    $region45: #{decoder_forward.2} parent=1 // pred_fallthru
      _
    // Predicated region
    $region46: #{decoder_forward.2} parent=1 // pred_check
      _
    $region47: #{decoder_forward.2} parent=1 // pred_check_branch
      %97 = sbr.rel (0) target = $region49
    $region48: #{decoder_forward.2} parent=1 // pred_region
      _
    $region49: #{decoder_forward.2} parent=1 // pred_fallthru
      _
    // Predicated region
    $region50: #{decoder_forward.2} parent=1 // pred_check
      _
    $region51: #{decoder_forward.2} parent=1 // pred_check_branch
      %99 = sbr.rel (0) target = $region53
    $region52: #{decoder_forward.2} parent=1 // pred_region
      _
    $region53: #{decoder_forward.2} parent=1 // pred_fallthru
      _
    // Predicated region
    $region54: #{decoder_forward.2} parent=1 // pred_check
      _
    $region55: #{decoder_forward.2} parent=1 // pred_check_branch
      %101 = sbr.rel (0) target = $region57
    $region56: #{decoder_forward.2} parent=1 // pred_region
      _
    $region57: #{decoder_forward.2} parent=1 // pred_fallthru
      _
    // Predicated region
    $region58: #{decoder_forward.2} parent=1 // pred_check
      _
    $region59: #{decoder_forward.2} parent=1 // pred_check_branch
      %103 = sbr.rel (0) target = $region61
    $region60: #{decoder_forward.2} parent=1 // pred_region
      %104 = dma.done [#allocation3], 3072
    $region61: #{decoder_forward.2} parent=1 // pred_fallthru
      _
    // Predicated region
    $region62: #{decoder_forward.2} parent=1 // pred_check
      _
    $region63: #{decoder_forward.2} parent=1 // pred_check_branch
      %106 = sbr.rel (0) target = $region65
    $region64: #{decoder_forward.2} parent=1 // pred_region
      %107 = dma.done [#allocation5], 3072
    $region65: #{decoder_forward.2} parent=1 // pred_fallthru
      _
    // Predicated region
    $region66: #{decoder_forward.2} parent=1 // pred_check
      _
    $region67: #{decoder_forward.2} parent=1 // pred_check_branch
      %109 = sbr.rel (0) target = $region69
    $region68: #{decoder_forward.2} parent=1 // pred_region
      %110 = dma.done [#allocation5], 3072
    $region69: #{decoder_forward.2} parent=1 // pred_fallthru
      _
    // Predicated region
    $region70: #{decoder_forward.2} parent=1 // pred_check
      _
    $region71: #{decoder_forward.2} parent=1 // pred_check_branch
      %112 = sbr.rel (0) target = $region73
    $region72: #{decoder_forward.2} parent=1 // pred_region
      %113 = dma.done [#allocation8], 48
    $region73: #{decoder_forward.2} parent=1 // pred_fallthru
      _
    // Predicated region
    $region74: #{decoder_forward.2} parent=1 // pred_check
      _
    $region75: #{decoder_forward.2} parent=1 // pred_check_branch
      %115 = sbr.rel (0) target = $region77
    $region76: #{decoder_forward.2} parent=1 // pred_region
      %116 = dma.done [#allocation8], 1024
    $region77: #{decoder_forward.2} parent=1 // pred_fallthru
      _
    %v117 = vld [vmem:[%s0] sm:$0xff]
    %v118 = vld [vmem:[%s1] sm:$0xff]
    %v119 = vld [vmem:[%s2] sm:$0xff]
    %v120 = vld [vmem:[%s2 + $0x8] sm:$0xff]
    %v121 = vld [vmem:[%s2 + $0x10] sm:$0xff]
    %v122 = vld [vmem:[%s2 + $0x18] sm:$0xff]
    %v123 = vld [vmem:[%s4] sm:$0x1]
    %v125 = vlaneseq
    %v126 = vshrl.u32 %v125, 7
    %v127 = vsub.s32 0, %v126
    %v128 = vrot.slane %v123, %v127
    %vm130 = vcmask 261120
    %v132 = vsel %vm130, %v117, 0
    %134 = vmatprep.subr.mxu0 0.0
    %135 = vmatpush1.msra.mxu0 0.0
    %136 = vmatprep.subr.mxu0 0.0
    %137 = vmatpush1.msra.mxu0 0.0
    %138 = vmatprep.subr.mxu0 0.0
    %139 = vmatpush1.msra.mxu0 0.0
    %140 = vmatprep.subr.mxu0 0.0
    %141 = vmatpush1.msra.mxu0 0.0
    %142 = vmatprep.subr.mxu0 0.0
    %143 = vmatpush1.msra.mxu0 0.0
    %144 = vmatprep.subr.mxu0 0.0
    %145 = vmatpush1.msra.mxu0 0.0
    %146 = vmatprep.subr.mxu0 0.0
    %147 = vmatpush1.msra.mxu0 0.0
    %148 = vmatprep.subr.mxu0 0.0
    %149 = vmatpush1.msra.mxu0 0.0
    %150 = vmatprep.subr.mxu0 0.0
    %151 = vmatpush1.msra.mxu0 0.0
    %152 = vmatprep.subr.mxu0 0.0
    %153 = vmatpush1.msra.mxu0 0.0
    %154 = vmatprep.subr.mxu0 0.0
    %155 = vmatpush1.msra.mxu0 0.0
    %156 = vmatprep.subr.mxu0 0.0
    %157 = vmatpush1.msra.mxu0 0.0
    %158 = vmatprep.subr.mxu0 0.0
    %159 = vmatpush1.msra.mxu0 %v122
    %160 = vmatprep.subr.mxu0 0.0
    %161 = vmatpush1.msra.mxu0 %v121
    %162 = vmatprep.subr.mxu0 0.0
    %163 = vmatpush1.msra.mxu0 %v120
    %164 = vmatprep.subr.mxu0 0.0
    %165 = vmatpush1.msra.mxu0 %v119
    %166 = vmatprep.subr.mxu0 0.0
    %167 = vmatpush2.msra.mxu0 0.0
    %168 = vmatprep.subr.mxu0 0.0
    %169 = vmatpush2.msra.mxu0 0.0
    %170 = vmatprep.subr.mxu0 0.0
    %171 = vmatpush2.msra.mxu0 0.0
    %172 = vmatprep.subr.mxu0 0.0
    %173 = vmatpush2.msra.mxu0 0.0
    %174 = vmatprep.subr.mxu0 0.0
    %175 = vmatpush2.msra.mxu0 0.0
    %176 = vmatprep.subr.mxu0 0.0
    %177 = vmatpush2.msra.mxu0 0.0
    %178 = vmatprep.subr.mxu0 0.0
    %179 = vmatpush2.msra.mxu0 0.0
    %180 = vmatprep.subr.mxu0 0.0
    %181 = vmatpush2.msra.mxu0 0.0
    %182 = vmatprep.subr.mxu0 0.0
    %183 = vmatpush2.msra.mxu0 0.0
    %184 = vmatprep.subr.mxu0 0.0
    %185 = vmatpush2.msra.mxu0 0.0
    %186 = vmatprep.subr.mxu0 0.0
    %187 = vmatpush2.msra.mxu0 0.0
    %188 = vmatprep.subr.mxu0 0.0
    %189 = vmatpush2.msra.mxu0 0.0
    %190 = vmatprep.subr.mxu0 0.0
    %191 = vmatpush2.msra.mxu0 0.0
    %192 = vmatprep.subr.mxu0 0.0
    %193 = vmatpush2.msra.mxu0 0.0
    %194 = vmatprep.subr.mxu0 0.0
    %195 = vmatpush2.msra.mxu0 0.0
    %196 = vmatprep.subr.mxu0 0.0
    %197 = vmatpush2.msra.mxu0 0.0
    %198 = vmatprep.mubr.f32.mxu0 0.0
    %199 = vmatmul.mubr.f32.gmra.mxu0 %v132
    %v200 = vpop.f32.mrf.mxu0
    %v201 = vadd.f32 %v128, %v200
    %v202 = vpop.f32.mrf.mxu0
    %203 = vdwg.mxu0
    %s204 = scalar_lea.vmem %s2, 32
    %v205 = vld [vmem:[%s204] sm:$0xff]
    %v206 = vld [vmem:[%s204 + $0x8] sm:$0xff]
    %v207 = vld [vmem:[%s204 + $0x10] sm:$0xff]
    %v208 = vld [vmem:[%s204 + $0x18] sm:$0xff]
    %s209 = scalar_lea.vmem %s4, 1
    %v210 = vld [vmem:[%s209] sm:$0x1]
    %v212 = vlaneseq
    %v213 = vshrl.u32 %v212, 7
    %v214 = vsub.s32 0, %v213
    %v215 = vrot.slane %v210, %v214
    %217 = vmatprep.subr.mxu0 0.0
    %218 = vmatpush1.msra.mxu0 0.0
    %219 = vmatprep.subr.mxu0 0.0
    %220 = vmatpush1.msra.mxu0 0.0
    %221 = vmatprep.subr.mxu0 0.0
    %222 = vmatpush1.msra.mxu0 0.0
    %223 = vmatprep.subr.mxu0 0.0
    %224 = vmatpush1.msra.mxu0 0.0
    %225 = vmatprep.subr.mxu0 0.0
    %226 = vmatpush1.msra.mxu0 0.0
    %227 = vmatprep.subr.mxu0 0.0
    %228 = vmatpush1.msra.mxu0 0.0
    %229 = vmatprep.subr.mxu0 0.0
    %230 = vmatpush1.msra.mxu0 0.0
    %231 = vmatprep.subr.mxu0 0.0
    %232 = vmatpush1.msra.mxu0 0.0
    %233 = vmatprep.subr.mxu0 0.0
    %234 = vmatpush1.msra.mxu0 0.0
    %235 = vmatprep.subr.mxu0 0.0
    %236 = vmatpush1.msra.mxu0 0.0
    %237 = vmatprep.subr.mxu0 0.0
    %238 = vmatpush1.msra.mxu0 0.0
    %239 = vmatprep.subr.mxu0 0.0
    %240 = vmatpush1.msra.mxu0 0.0
    %241 = vmatprep.subr.mxu0 0.0
    %242 = vmatpush1.msra.mxu0 %v208
    %243 = vmatprep.subr.mxu0 0.0
    %244 = vmatpush1.msra.mxu0 %v207
    %245 = vmatprep.subr.mxu0 0.0
    %246 = vmatpush1.msra.mxu0 %v206
    %247 = vmatprep.subr.mxu0 0.0
    %248 = vmatpush1.msra.mxu0 %v205
    %249 = vmatprep.subr.mxu0 0.0
    %250 = vmatpush2.msra.mxu0 0.0
    %251 = vmatprep.subr.mxu0 0.0
    %252 = vmatpush2.msra.mxu0 0.0
    %253 = vmatprep.subr.mxu0 0.0
    %254 = vmatpush2.msra.mxu0 0.0
    %255 = vmatprep.subr.mxu0 0.0
    %256 = vmatpush2.msra.mxu0 0.0
    %257 = vmatprep.subr.mxu0 0.0
    %258 = vmatpush2.msra.mxu0 0.0
    %259 = vmatprep.subr.mxu0 0.0
    %260 = vmatpush2.msra.mxu0 0.0
    %261 = vmatprep.subr.mxu0 0.0
    %262 = vmatpush2.msra.mxu0 0.0
    %263 = vmatprep.subr.mxu0 0.0
    %264 = vmatpush2.msra.mxu0 0.0
    %265 = vmatprep.subr.mxu0 0.0
    %266 = vmatpush2.msra.mxu0 0.0
    %267 = vmatprep.subr.mxu0 0.0
    %268 = vmatpush2.msra.mxu0 0.0
    %269 = vmatprep.subr.mxu0 0.0
    %270 = vmatpush2.msra.mxu0 0.0
    %271 = vmatprep.subr.mxu0 0.0
    %272 = vmatpush2.msra.mxu0 0.0
    %273 = vmatprep.subr.mxu0 0.0
    %274 = vmatpush2.msra.mxu0 0.0
    %275 = vmatprep.subr.mxu0 0.0
    %276 = vmatpush2.msra.mxu0 0.0
    %277 = vmatprep.subr.mxu0 0.0
    %278 = vmatpush2.msra.mxu0 0.0
    %279 = vmatprep.subr.mxu0 0.0
    %280 = vmatpush2.msra.mxu0 0.0
    %281 = vmatprep.mubr.f32.mxu0 0.0
    %282 = vmatmul.mubr.f32.gmra.mxu0 %v132
    %v283 = vpop.f32.mrf.mxu0
    %v284 = vadd.f32 %v215, %v283
    %v285 = vpop.f32.mrf.mxu0
    %286 = vdwg.mxu0
    %s287 = scalar_lea.vmem %s2, 64
    %v288 = vld [vmem:[%s287] sm:$0xff]
    %v289 = vld [vmem:[%s287 + $0x8] sm:$0xff]
    %v290 = vld [vmem:[%s287 + $0x10] sm:$0xff]
    %v291 = vld [vmem:[%s287 + $0x18] sm:$0xff]
    %s292 = scalar_lea.vmem %s4, 2
    %v293 = vld [vmem:[%s292] sm:$0x1]
    %v295 = vlaneseq
    %v296 = vshrl.u32 %v295, 7
    %v297 = vsub.s32 0, %v296
    %v298 = vrot.slane %v293, %v297
    %300 = vmatprep.subr.mxu0 0.0
    %301 = vmatpush1.msra.mxu0 0.0
    %302 = vmatprep.subr.mxu0 0.0
    %303 = vmatpush1.msra.mxu0 0.0
    %304 = vmatprep.subr.mxu0 0.0
    %305 = vmatpush1.msra.mxu0 0.0
    %306 = vmatprep.subr.mxu0 0.0
    %307 = vmatpush1.msra.mxu0 0.0
    %308 = vmatprep.subr.mxu0 0.0
    %309 = vmatpush1.msra.mxu0 0.0
    %310 = vmatprep.subr.mxu0 0.0
    %311 = vmatpush1.msra.mxu0 0.0
    %312 = vmatprep.subr.mxu0 0.0
    %313 = vmatpush1.msra.mxu0 0.0
    %314 = vmatprep.subr.mxu0 0.0
    %315 = vmatpush1.msra.mxu0 0.0
    %316 = vmatprep.subr.mxu0 0.0
    %317 = vmatpush1.msra.mxu0 0.0
    %318 = vmatprep.subr.mxu0 0.0
    %319 = vmatpush1.msra.mxu0 0.0
    %320 = vmatprep.subr.mxu0 0.0
    %321 = vmatpush1.msra.mxu0 0.0
    %322 = vmatprep.subr.mxu0 0.0
    %323 = vmatpush1.msra.mxu0 0.0
    %324 = vmatprep.subr.mxu0 0.0
    %325 = vmatpush1.msra.mxu0 %v291
    %326 = vmatprep.subr.mxu0 0.0
    %327 = vmatpush1.msra.mxu0 %v290
    %328 = vmatprep.subr.mxu0 0.0
    %329 = vmatpush1.msra.mxu0 %v289
    %330 = vmatprep.subr.mxu0 0.0
    %331 = vmatpush1.msra.mxu0 %v288
    %332 = vmatprep.subr.mxu0 0.0
    %333 = vmatpush2.msra.mxu0 0.0
    %334 = vmatprep.subr.mxu0 0.0
    %335 = vmatpush2.msra.mxu0 0.0
    %336 = vmatprep.subr.mxu0 0.0
    %337 = vmatpush2.msra.mxu0 0.0
    %338 = vmatprep.subr.mxu0 0.0
    %339 = vmatpush2.msra.mxu0 0.0
    %340 = vmatprep.subr.mxu0 0.0
    %341 = vmatpush2.msra.mxu0 0.0
    %342 = vmatprep.subr.mxu0 0.0
    %343 = vmatpush2.msra.mxu0 0.0
    %344 = vmatprep.subr.mxu0 0.0
    %345 = vmatpush2.msra.mxu0 0.0
    %346 = vmatprep.subr.mxu0 0.0
    %347 = vmatpush2.msra.mxu0 0.0
    %348 = vmatprep.subr.mxu0 0.0
    %349 = vmatpush2.msra.mxu0 0.0
    %350 = vmatprep.subr.mxu0 0.0
    %351 = vmatpush2.msra.mxu0 0.0
    %352 = vmatprep.subr.mxu0 0.0
    %353 = vmatpush2.msra.mxu0 0.0
    %354 = vmatprep.subr.mxu0 0.0
    %355 = vmatpush2.msra.mxu0 0.0
    %356 = vmatprep.subr.mxu0 0.0
    %357 = vmatpush2.msra.mxu0 0.0
    %358 = vmatprep.subr.mxu0 0.0
    %359 = vmatpush2.msra.mxu0 0.0
    %360 = vmatprep.subr.mxu0 0.0
    %361 = vmatpush2.msra.mxu0 0.0
    %362 = vmatprep.subr.mxu0 0.0
    %363 = vmatpush2.msra.mxu0 0.0
    %364 = vmatprep.mubr.f32.mxu0 0.0
    %365 = vmatmul.mubr.f32.gmra.mxu0 %v132
    %v366 = vpop.f32.mrf.mxu0
    %v367 = vadd.f32 %v298, %v366
    %v368 = vpop.f32.mrf.mxu0
    %369 = vdwg.mxu0
    %v370 = vld [vmem:[#allocation2] sm:$0xff]
    %v371 = vld [vmem:[#allocation2 + $0x8] sm:$0xff]
    %v372 = vld [vmem:[#allocation2 + $0x10] sm:$0xff]
    %v373 = vld [vmem:[#allocation2 + $0x18] sm:$0xff]
    %v374 = vld [vmem:[#allocation2 + $0x20] sm:$0xff]
    %v375 = vld [vmem:[#allocation2 + $0x28] sm:$0xff]
    %v376 = vld [vmem:[#allocation2 + $0x30] sm:$0xff]
    %v377 = vld [vmem:[#allocation2 + $0x38] sm:$0xff]
    %v378 = vld [vmem:[%s5] sm:$0x1]
    %v380 = vlaneseq
    %v381 = vshrl.u32 %v380, 7
    %v382 = vsub.s32 0, %v381
    %v383 = vrot.slane %v378, %v382
    %vm385 = vcmask 523264
    %v387 = vsel %vm385, %v118, 0
    %389 = vmatprep.subr.mxu0 0.0
    %390 = vmatpush1.msra.mxu0 0.0
    %391 = vmatprep.subr.mxu0 0.0
    %392 = vmatpush1.msra.mxu0 0.0
    %393 = vmatprep.subr.mxu0 0.0
    %394 = vmatpush1.msra.mxu0 0.0
    %395 = vmatprep.subr.mxu0 0.0
    %396 = vmatpush1.msra.mxu0 0.0
    %397 = vmatprep.subr.mxu0 0.0
    %398 = vmatpush1.msra.mxu0 0.0
    %399 = vmatprep.subr.mxu0 0.0
    %400 = vmatpush1.msra.mxu0 0.0
    %401 = vmatprep.subr.mxu0 0.0
    %402 = vmatpush1.msra.mxu0 0.0
    %403 = vmatprep.subr.mxu0 0.0
    %404 = vmatpush1.msra.mxu0 0.0
    %405 = vmatprep.subr.mxu0 0.0
    %406 = vmatpush1.msra.mxu0 %v377
    %407 = vmatprep.subr.mxu0 0.0
    %408 = vmatpush1.msra.mxu0 %v376
    %409 = vmatprep.subr.mxu0 0.0
    %410 = vmatpush1.msra.mxu0 %v375
    %411 = vmatprep.subr.mxu0 0.0
    %412 = vmatpush1.msra.mxu0 %v374
    %413 = vmatprep.subr.mxu0 0.0
    %414 = vmatpush1.msra.mxu0 %v373
    %415 = vmatprep.subr.mxu0 0.0
    %416 = vmatpush1.msra.mxu0 %v372
    %417 = vmatprep.subr.mxu0 0.0
    %418 = vmatpush1.msra.mxu0 %v371
    %419 = vmatprep.subr.mxu0 0.0
    %420 = vmatpush1.msra.mxu0 %v370
    %421 = vmatprep.subr.mxu0 0.0
    %422 = vmatpush2.msra.mxu0 0.0
    %423 = vmatprep.subr.mxu0 0.0
    %424 = vmatpush2.msra.mxu0 0.0
    %425 = vmatprep.subr.mxu0 0.0
    %426 = vmatpush2.msra.mxu0 0.0
    %427 = vmatprep.subr.mxu0 0.0
    %428 = vmatpush2.msra.mxu0 0.0
    %429 = vmatprep.subr.mxu0 0.0
    %430 = vmatpush2.msra.mxu0 0.0
    %431 = vmatprep.subr.mxu0 0.0
    %432 = vmatpush2.msra.mxu0 0.0
    %433 = vmatprep.subr.mxu0 0.0
    %434 = vmatpush2.msra.mxu0 0.0
    %435 = vmatprep.subr.mxu0 0.0
    %436 = vmatpush2.msra.mxu0 0.0
    %437 = vmatprep.subr.mxu0 0.0
    %438 = vmatpush2.msra.mxu0 0.0
    %439 = vmatprep.subr.mxu0 0.0
    %440 = vmatpush2.msra.mxu0 0.0
    %441 = vmatprep.subr.mxu0 0.0
    %442 = vmatpush2.msra.mxu0 0.0
    %443 = vmatprep.subr.mxu0 0.0
    %444 = vmatpush2.msra.mxu0 0.0
    %445 = vmatprep.subr.mxu0 0.0
    %446 = vmatpush2.msra.mxu0 0.0
    %447 = vmatprep.subr.mxu0 0.0
    %448 = vmatpush2.msra.mxu0 0.0
    %449 = vmatprep.subr.mxu0 0.0
    %450 = vmatpush2.msra.mxu0 0.0
    %451 = vmatprep.subr.mxu0 0.0
    %452 = vmatpush2.msra.mxu0 0.0
    %453 = vmatprep.mubr.f32.mxu0 0.0
    %454 = vmatmul.mubr.f32.gmra.mxu0 %v387
    %v455 = vpop.f32.mrf.mxu0
    %v456 = vadd.f32 %v383, %v455
    %v457 = vpop.f32.mrf.mxu0
    %458 = vdwg.mxu0
    %s459 = scalar_lea.vmem [#allocation2], 64
    %v460 = vld [vmem:[%s459] sm:$0xff]
    %v461 = vld [vmem:[%s459 + $0x8] sm:$0xff]
    %v462 = vld [vmem:[%s459 + $0x10] sm:$0xff]
    %v463 = vld [vmem:[%s459 + $0x18] sm:$0xff]
    %v464 = vld [vmem:[%s459 + $0x20] sm:$0xff]
    %v465 = vld [vmem:[%s459 + $0x28] sm:$0xff]
    %v466 = vld [vmem:[%s459 + $0x30] sm:$0xff]
    %v467 = vld [vmem:[%s459 + $0x38] sm:$0xff]
    %s468 = scalar_lea.vmem %s5, 1
    %v469 = vld [vmem:[%s468] sm:$0x1]
    %v471 = vlaneseq
    %v472 = vshrl.u32 %v471, 7
    %v473 = vsub.s32 0, %v472
    %v474 = vrot.slane %v469, %v473
    %476 = vmatprep.subr.mxu0 0.0
    %477 = vmatpush1.msra.mxu0 0.0
    %478 = vmatprep.subr.mxu0 0.0
    %479 = vmatpush1.msra.mxu0 0.0
    %480 = vmatprep.subr.mxu0 0.0
    %481 = vmatpush1.msra.mxu0 0.0
    %482 = vmatprep.subr.mxu0 0.0
    %483 = vmatpush1.msra.mxu0 0.0
    %484 = vmatprep.subr.mxu0 0.0
    %485 = vmatpush1.msra.mxu0 0.0
    %486 = vmatprep.subr.mxu0 0.0
    %487 = vmatpush1.msra.mxu0 0.0
    %488 = vmatprep.subr.mxu0 0.0
    %489 = vmatpush1.msra.mxu0 0.0
    %490 = vmatprep.subr.mxu0 0.0
    %491 = vmatpush1.msra.mxu0 0.0
    %492 = vmatprep.subr.mxu0 0.0
    %493 = vmatpush1.msra.mxu0 %v467
    %494 = vmatprep.subr.mxu0 0.0
    %495 = vmatpush1.msra.mxu0 %v466
    %496 = vmatprep.subr.mxu0 0.0
    %497 = vmatpush1.msra.mxu0 %v465
    %498 = vmatprep.subr.mxu0 0.0
    %499 = vmatpush1.msra.mxu0 %v464
    %500 = vmatprep.subr.mxu0 0.0
    %501 = vmatpush1.msra.mxu0 %v463
    %502 = vmatprep.subr.mxu0 0.0
    %503 = vmatpush1.msra.mxu0 %v462
    %504 = vmatprep.subr.mxu0 0.0
    %505 = vmatpush1.msra.mxu0 %v461
    %506 = vmatprep.subr.mxu0 0.0
    %507 = vmatpush1.msra.mxu0 %v460
    %508 = vmatprep.subr.mxu0 0.0
    %509 = vmatpush2.msra.mxu0 0.0
    %510 = vmatprep.subr.mxu0 0.0
    %511 = vmatpush2.msra.mxu0 0.0
    %512 = vmatprep.subr.mxu0 0.0
    %513 = vmatpush2.msra.mxu0 0.0
    %514 = vmatprep.subr.mxu0 0.0
    %515 = vmatpush2.msra.mxu0 0.0
    %516 = vmatprep.subr.mxu0 0.0
    %517 = vmatpush2.msra.mxu0 0.0
    %518 = vmatprep.subr.mxu0 0.0
    %519 = vmatpush2.msra.mxu0 0.0
    %520 = vmatprep.subr.mxu0 0.0
    %521 = vmatpush2.msra.mxu0 0.0
    %522 = vmatprep.subr.mxu0 0.0
    %523 = vmatpush2.msra.mxu0 0.0
    %524 = vmatprep.subr.mxu0 0.0
    %525 = vmatpush2.msra.mxu0 0.0
    %526 = vmatprep.subr.mxu0 0.0
    %527 = vmatpush2.msra.mxu0 0.0
    %528 = vmatprep.subr.mxu0 0.0
    %529 = vmatpush2.msra.mxu0 0.0
    %530 = vmatprep.subr.mxu0 0.0
    %531 = vmatpush2.msra.mxu0 0.0
    %532 = vmatprep.subr.mxu0 0.0
    %533 = vmatpush2.msra.mxu0 0.0
    %534 = vmatprep.subr.mxu0 0.0
    %535 = vmatpush2.msra.mxu0 0.0
    %536 = vmatprep.subr.mxu0 0.0
    %537 = vmatpush2.msra.mxu0 0.0
    %538 = vmatprep.subr.mxu0 0.0
    %539 = vmatpush2.msra.mxu0 0.0
    %540 = vmatprep.mubr.f32.mxu0 0.0
    %541 = vmatmul.mubr.f32.gmra.mxu0 %v387
    %v542 = vpop.f32.mrf.mxu0
    %v543 = vadd.f32 %v474, %v542
    %v544 = vpop.f32.mrf.mxu0
    %545 = vdwg.mxu0
    %s546 = scalar_lea.vmem [#allocation2], 128
    %v547 = vld [vmem:[%s546] sm:$0xff]
    %v548 = vld [vmem:[%s546 + $0x8] sm:$0xff]
    %v549 = vld [vmem:[%s546 + $0x10] sm:$0xff]
    %v550 = vld [vmem:[%s546 + $0x18] sm:$0xff]
    %v551 = vld [vmem:[%s546 + $0x20] sm:$0xff]
    %v552 = vld [vmem:[%s546 + $0x28] sm:$0xff]
    %v553 = vld [vmem:[%s546 + $0x30] sm:$0xff]
    %v554 = vld [vmem:[%s546 + $0x38] sm:$0xff]
    %s555 = scalar_lea.vmem %s5, 2
    %v556 = vld [vmem:[%s555] sm:$0x1]
    %v558 = vlaneseq
    %v559 = vshrl.u32 %v558, 7
    %v560 = vsub.s32 0, %v559
    %v561 = vrot.slane %v556, %v560
    %563 = vmatprep.subr.mxu0 0.0
    %564 = vmatpush1.msra.mxu0 0.0
    %565 = vmatprep.subr.mxu0 0.0
    %566 = vmatpush1.msra.mxu0 0.0
    %567 = vmatprep.subr.mxu0 0.0
    %568 = vmatpush1.msra.mxu0 0.0
    %569 = vmatprep.subr.mxu0 0.0
    %570 = vmatpush1.msra.mxu0 0.0
    %571 = vmatprep.subr.mxu0 0.0
    %572 = vmatpush1.msra.mxu0 0.0
    %573 = vmatprep.subr.mxu0 0.0
    %574 = vmatpush1.msra.mxu0 0.0
    %575 = vmatprep.subr.mxu0 0.0
    %576 = vmatpush1.msra.mxu0 0.0
    %577 = vmatprep.subr.mxu0 0.0
    %578 = vmatpush1.msra.mxu0 0.0
    %579 = vmatprep.subr.mxu0 0.0
    %580 = vmatpush1.msra.mxu0 %v554
    %581 = vmatprep.subr.mxu0 0.0
    %582 = vmatpush1.msra.mxu0 %v553
    %583 = vmatprep.subr.mxu0 0.0
    %584 = vmatpush1.msra.mxu0 %v552
    %585 = vmatprep.subr.mxu0 0.0
    %586 = vmatpush1.msra.mxu0 %v551
    %587 = vmatprep.subr.mxu0 0.0
    %588 = vmatpush1.msra.mxu0 %v550
    %589 = vmatprep.subr.mxu0 0.0
    %590 = vmatpush1.msra.mxu0 %v549
    %591 = vmatprep.subr.mxu0 0.0
    %592 = vmatpush1.msra.mxu0 %v548
    %593 = vmatprep.subr.mxu0 0.0
    %594 = vmatpush1.msra.mxu0 %v547
    %595 = vmatprep.subr.mxu0 0.0
    %596 = vmatpush2.msra.mxu0 0.0
    %597 = vmatprep.subr.mxu0 0.0
    %598 = vmatpush2.msra.mxu0 0.0
    %599 = vmatprep.subr.mxu0 0.0
    %600 = vmatpush2.msra.mxu0 0.0
    %601 = vmatprep.subr.mxu0 0.0
    %602 = vmatpush2.msra.mxu0 0.0
    %603 = vmatprep.subr.mxu0 0.0
    %604 = vmatpush2.msra.mxu0 0.0
    %605 = vmatprep.subr.mxu0 0.0
    %606 = vmatpush2.msra.mxu0 0.0
    %607 = vmatprep.subr.mxu0 0.0
    %608 = vmatpush2.msra.mxu0 0.0
    %609 = vmatprep.subr.mxu0 0.0
    %610 = vmatpush2.msra.mxu0 0.0
    %611 = vmatprep.subr.mxu0 0.0
    %612 = vmatpush2.msra.mxu0 0.0
    %613 = vmatprep.subr.mxu0 0.0
    %614 = vmatpush2.msra.mxu0 0.0
    %615 = vmatprep.subr.mxu0 0.0
    %616 = vmatpush2.msra.mxu0 0.0
    %617 = vmatprep.subr.mxu0 0.0
    %618 = vmatpush2.msra.mxu0 0.0
    %619 = vmatprep.subr.mxu0 0.0
    %620 = vmatpush2.msra.mxu0 0.0
    %621 = vmatprep.subr.mxu0 0.0
    %622 = vmatpush2.msra.mxu0 0.0
    %623 = vmatprep.subr.mxu0 0.0
    %624 = vmatpush2.msra.mxu0 0.0
    %625 = vmatprep.subr.mxu0 0.0
    %626 = vmatpush2.msra.mxu0 0.0
    %627 = vmatprep.mubr.f32.mxu0 0.0
    %628 = vmatmul.mubr.f32.gmra.mxu0 %v387
    %v629 = vpop.f32.mrf.mxu0
    %v630 = vadd.f32 %v561, %v629
    %v631 = vpop.f32.mrf.mxu0
    %632 = vdwg.mxu0
    %v633 = vadd.f32 %v201, %v456
    %v634 = vxor.u32 %v633, 2147483648
    %v635 = vmul.f32 %v634, 1.442695
    %v636 = vpow.pop %v635
    %v637 = vadd.f32 %v636, 1.0
    %v638 = vrcp.pop %v637
    %v639 = vmul.f32 1.0, %v638
    %v640 = vadd.f32 %v284, %v543
    %v641 = vxor.u32 %v640, 2147483648
    %v642 = vmul.f32 %v641, 1.442695
    %v643 = vpow.pop %v642
    %v644 = vadd.f32 %v643, 1.0
    %v645 = vrcp.pop %v644
    %v646 = vmul.f32 1.0, %v645
    %v647 = vmul.f32 %v639, %v630
    %v648 = vadd.f32 %v367, %v647
    %v649 = vtanh.pop %v648
    %v650 = vsub.f32 1.0, %v646
    %v651 = vmul.f32 %v650, %v649
    %v652 = vmul.f32 %v646, %v118
    %v653 = vadd.f32 %v651, %v652
    %654 = vst.msk [vmem:[%s15] sm:$0xff] %vm385, %v653
    %s655 = scalar_lea.vmem %s1, 8
    %v656 = vld [vmem:[%s655] sm:$0xff]
    %v657 = vld [vmem:[#allocation4] sm:$0xff]
    %v658 = vld [vmem:[#allocation4 + $0x8] sm:$0xff]
    %v659 = vld [vmem:[#allocation4 + $0x10] sm:$0xff]
    %v660 = vld [vmem:[#allocation4 + $0x18] sm:$0xff]
    %v661 = vld [vmem:[#allocation4 + $0x20] sm:$0xff]
    %v662 = vld [vmem:[#allocation4 + $0x28] sm:$0xff]
    %v663 = vld [vmem:[#allocation4 + $0x30] sm:$0xff]
    %v664 = vld [vmem:[#allocation4 + $0x38] sm:$0xff]
    %v665 = vld [vmem:[#allocation7] sm:$0x1]
    %v667 = vlaneseq
    %v668 = vshrl.u32 %v667, 7
    %v669 = vsub.s32 0, %v668
    %v670 = vrot.slane %v665, %v669
    %v673 = vsel %vm385, %v653, 0
    %675 = vmatprep.subr.mxu0 0.0
    %676 = vmatpush1.msra.mxu0 0.0
    %677 = vmatprep.subr.mxu0 0.0
    %678 = vmatpush1.msra.mxu0 0.0
    %679 = vmatprep.subr.mxu0 0.0
    %680 = vmatpush1.msra.mxu0 0.0
    %681 = vmatprep.subr.mxu0 0.0
    %682 = vmatpush1.msra.mxu0 0.0
    %683 = vmatprep.subr.mxu0 0.0
    %684 = vmatpush1.msra.mxu0 0.0
    %685 = vmatprep.subr.mxu0 0.0
    %686 = vmatpush1.msra.mxu0 0.0
    %687 = vmatprep.subr.mxu0 0.0
    %688 = vmatpush1.msra.mxu0 0.0
    %689 = vmatprep.subr.mxu0 0.0
    %690 = vmatpush1.msra.mxu0 0.0
    %691 = vmatprep.subr.mxu0 0.0
    %692 = vmatpush1.msra.mxu0 %v664
    %693 = vmatprep.subr.mxu0 0.0
    %694 = vmatpush1.msra.mxu0 %v663
    %695 = vmatprep.subr.mxu0 0.0
    %696 = vmatpush1.msra.mxu0 %v662
    %697 = vmatprep.subr.mxu0 0.0
    %698 = vmatpush1.msra.mxu0 %v661
    %699 = vmatprep.subr.mxu0 0.0
    %700 = vmatpush1.msra.mxu0 %v660
    %701 = vmatprep.subr.mxu0 0.0
    %702 = vmatpush1.msra.mxu0 %v659
    %703 = vmatprep.subr.mxu0 0.0
    %704 = vmatpush1.msra.mxu0 %v658
    %705 = vmatprep.subr.mxu0 0.0
    %706 = vmatpush1.msra.mxu0 %v657
    %707 = vmatprep.subr.mxu0 0.0
    %708 = vmatpush2.msra.mxu0 0.0
    %709 = vmatprep.subr.mxu0 0.0
    %710 = vmatpush2.msra.mxu0 0.0
    %711 = vmatprep.subr.mxu0 0.0
    %712 = vmatpush2.msra.mxu0 0.0
    %713 = vmatprep.subr.mxu0 0.0
    %714 = vmatpush2.msra.mxu0 0.0
    %715 = vmatprep.subr.mxu0 0.0
    %716 = vmatpush2.msra.mxu0 0.0
    %717 = vmatprep.subr.mxu0 0.0
    %718 = vmatpush2.msra.mxu0 0.0
    %719 = vmatprep.subr.mxu0 0.0
    %720 = vmatpush2.msra.mxu0 0.0
    %721 = vmatprep.subr.mxu0 0.0
    %722 = vmatpush2.msra.mxu0 0.0
    %723 = vmatprep.subr.mxu0 0.0
    %724 = vmatpush2.msra.mxu0 0.0
    %725 = vmatprep.subr.mxu0 0.0
    %726 = vmatpush2.msra.mxu0 0.0
    %727 = vmatprep.subr.mxu0 0.0
    %728 = vmatpush2.msra.mxu0 0.0
    %729 = vmatprep.subr.mxu0 0.0
    %730 = vmatpush2.msra.mxu0 0.0
    %731 = vmatprep.subr.mxu0 0.0
    %732 = vmatpush2.msra.mxu0 0.0
    %733 = vmatprep.subr.mxu0 0.0
    %734 = vmatpush2.msra.mxu0 0.0
    %735 = vmatprep.subr.mxu0 0.0
    %736 = vmatpush2.msra.mxu0 0.0
    %737 = vmatprep.subr.mxu0 0.0
    %738 = vmatpush2.msra.mxu0 0.0
    %739 = vmatprep.mubr.f32.mxu0 0.0
    %740 = vmatmul.mubr.f32.gmra.mxu0 %v673
    %v741 = vpop.f32.mrf.mxu0
    %v742 = vadd.f32 %v670, %v741
    %v743 = vpop.f32.mrf.mxu0
    %744 = vdwg.mxu0
    %s745 = scalar_lea.vmem [#allocation4], 64
    %v746 = vld [vmem:[%s745] sm:$0xff]
    %v747 = vld [vmem:[%s745 + $0x8] sm:$0xff]
    %v748 = vld [vmem:[%s745 + $0x10] sm:$0xff]
    %v749 = vld [vmem:[%s745 + $0x18] sm:$0xff]
    %v750 = vld [vmem:[%s745 + $0x20] sm:$0xff]
    %v751 = vld [vmem:[%s745 + $0x28] sm:$0xff]
    %v752 = vld [vmem:[%s745 + $0x30] sm:$0xff]
    %v753 = vld [vmem:[%s745 + $0x38] sm:$0xff]
    %s754 = scalar_lea.vmem [#allocation7], 1
    %v755 = vld [vmem:[%s754] sm:$0x1]
    %v757 = vlaneseq
    %v758 = vshrl.u32 %v757, 7
    %v759 = vsub.s32 0, %v758
    %v760 = vrot.slane %v755, %v759
    %762 = vmatprep.subr.mxu0 0.0
    %763 = vmatpush1.msra.mxu0 0.0
    %764 = vmatprep.subr.mxu0 0.0
    %765 = vmatpush1.msra.mxu0 0.0
    %766 = vmatprep.subr.mxu0 0.0
    %767 = vmatpush1.msra.mxu0 0.0
    %768 = vmatprep.subr.mxu0 0.0
    %769 = vmatpush1.msra.mxu0 0.0
    %770 = vmatprep.subr.mxu0 0.0
    %771 = vmatpush1.msra.mxu0 0.0
    %772 = vmatprep.subr.mxu0 0.0
    %773 = vmatpush1.msra.mxu0 0.0
    %774 = vmatprep.subr.mxu0 0.0
    %775 = vmatpush1.msra.mxu0 0.0
    %776 = vmatprep.subr.mxu0 0.0
    %777 = vmatpush1.msra.mxu0 0.0
    %778 = vmatprep.subr.mxu0 0.0
    %779 = vmatpush1.msra.mxu0 %v753
    %780 = vmatprep.subr.mxu0 0.0
    %781 = vmatpush1.msra.mxu0 %v752
    %782 = vmatprep.subr.mxu0 0.0
    %783 = vmatpush1.msra.mxu0 %v751
    %784 = vmatprep.subr.mxu0 0.0
    %785 = vmatpush1.msra.mxu0 %v750
    %786 = vmatprep.subr.mxu0 0.0
    %787 = vmatpush1.msra.mxu0 %v749
    %788 = vmatprep.subr.mxu0 0.0
    %789 = vmatpush1.msra.mxu0 %v748
    %790 = vmatprep.subr.mxu0 0.0
    %791 = vmatpush1.msra.mxu0 %v747
    %792 = vmatprep.subr.mxu0 0.0
    %793 = vmatpush1.msra.mxu0 %v746
    %794 = vmatprep.subr.mxu0 0.0
    %795 = vmatpush2.msra.mxu0 0.0
    %796 = vmatprep.subr.mxu0 0.0
    %797 = vmatpush2.msra.mxu0 0.0
    %798 = vmatprep.subr.mxu0 0.0
    %799 = vmatpush2.msra.mxu0 0.0
    %800 = vmatprep.subr.mxu0 0.0
    %801 = vmatpush2.msra.mxu0 0.0
    %802 = vmatprep.subr.mxu0 0.0
    %803 = vmatpush2.msra.mxu0 0.0
    %804 = vmatprep.subr.mxu0 0.0
    %805 = vmatpush2.msra.mxu0 0.0
    %806 = vmatprep.subr.mxu0 0.0
    %807 = vmatpush2.msra.mxu0 0.0
    %808 = vmatprep.subr.mxu0 0.0
    %809 = vmatpush2.msra.mxu0 0.0
    %810 = vmatprep.subr.mxu0 0.0
    %811 = vmatpush2.msra.mxu0 0.0
    %812 = vmatprep.subr.mxu0 0.0
    %813 = vmatpush2.msra.mxu0 0.0
    %814 = vmatprep.subr.mxu0 0.0
    %815 = vmatpush2.msra.mxu0 0.0
    %816 = vmatprep.subr.mxu0 0.0
    %817 = vmatpush2.msra.mxu0 0.0
    %818 = vmatprep.subr.mxu0 0.0
    %819 = vmatpush2.msra.mxu0 0.0
    %820 = vmatprep.subr.mxu0 0.0
    %821 = vmatpush2.msra.mxu0 0.0
    %822 = vmatprep.subr.mxu0 0.0
    %823 = vmatpush2.msra.mxu0 0.0
    %824 = vmatprep.subr.mxu0 0.0
    %825 = vmatpush2.msra.mxu0 0.0
    %826 = vmatprep.mubr.f32.mxu0 0.0
    %827 = vmatmul.mubr.f32.gmra.mxu0 %v673
    %v828 = vpop.f32.mrf.mxu0
    %v829 = vadd.f32 %v760, %v828
    %v830 = vpop.f32.mrf.mxu0
    %831 = vdwg.mxu0
    %s832 = scalar_lea.vmem [#allocation4], 128
    %v833 = vld [vmem:[%s832] sm:$0xff]
    %v834 = vld [vmem:[%s832 + $0x8] sm:$0xff]
    %v835 = vld [vmem:[%s832 + $0x10] sm:$0xff]
    %v836 = vld [vmem:[%s832 + $0x18] sm:$0xff]
    %v837 = vld [vmem:[%s832 + $0x20] sm:$0xff]
    %v838 = vld [vmem:[%s832 + $0x28] sm:$0xff]
    %v839 = vld [vmem:[%s832 + $0x30] sm:$0xff]
    %v840 = vld [vmem:[%s832 + $0x38] sm:$0xff]
    %s841 = scalar_lea.vmem [#allocation7], 2
    %v842 = vld [vmem:[%s841] sm:$0x1]
    %v844 = vlaneseq
    %v845 = vshrl.u32 %v844, 7
    %v846 = vsub.s32 0, %v845
    %v847 = vrot.slane %v842, %v846
    %849 = vmatprep.subr.mxu0 0.0
    %850 = vmatpush1.msra.mxu0 0.0
    %851 = vmatprep.subr.mxu0 0.0
    %852 = vmatpush1.msra.mxu0 0.0
    %853 = vmatprep.subr.mxu0 0.0
    %854 = vmatpush1.msra.mxu0 0.0
    %855 = vmatprep.subr.mxu0 0.0
    %856 = vmatpush1.msra.mxu0 0.0
    %857 = vmatprep.subr.mxu0 0.0
    %858 = vmatpush1.msra.mxu0 0.0
    %859 = vmatprep.subr.mxu0 0.0
    %860 = vmatpush1.msra.mxu0 0.0
    %861 = vmatprep.subr.mxu0 0.0
    %862 = vmatpush1.msra.mxu0 0.0
    %863 = vmatprep.subr.mxu0 0.0
    %864 = vmatpush1.msra.mxu0 0.0
    %865 = vmatprep.subr.mxu0 0.0
    %866 = vmatpush1.msra.mxu0 %v840
    %867 = vmatprep.subr.mxu0 0.0
    %868 = vmatpush1.msra.mxu0 %v839
    %869 = vmatprep.subr.mxu0 0.0
    %870 = vmatpush1.msra.mxu0 %v838
    %871 = vmatprep.subr.mxu0 0.0
    %872 = vmatpush1.msra.mxu0 %v837
    %873 = vmatprep.subr.mxu0 0.0
    %874 = vmatpush1.msra.mxu0 %v836
    %875 = vmatprep.subr.mxu0 0.0
    %876 = vmatpush1.msra.mxu0 %v835
    %877 = vmatprep.subr.mxu0 0.0
    %878 = vmatpush1.msra.mxu0 %v834
    %879 = vmatprep.subr.mxu0 0.0
    %880 = vmatpush1.msra.mxu0 %v833
    %881 = vmatprep.subr.mxu0 0.0
    %882 = vmatpush2.msra.mxu0 0.0
    %883 = vmatprep.subr.mxu0 0.0
    %884 = vmatpush2.msra.mxu0 0.0
    %885 = vmatprep.subr.mxu0 0.0
    %886 = vmatpush2.msra.mxu0 0.0
    %887 = vmatprep.subr.mxu0 0.0
    %888 = vmatpush2.msra.mxu0 0.0
    %889 = vmatprep.subr.mxu0 0.0
    %890 = vmatpush2.msra.mxu0 0.0
    %891 = vmatprep.subr.mxu0 0.0
    %892 = vmatpush2.msra.mxu0 0.0
    %893 = vmatprep.subr.mxu0 0.0
    %894 = vmatpush2.msra.mxu0 0.0
    %895 = vmatprep.subr.mxu0 0.0
    %896 = vmatpush2.msra.mxu0 0.0
    %897 = vmatprep.subr.mxu0 0.0
    %898 = vmatpush2.msra.mxu0 0.0
    %899 = vmatprep.subr.mxu0 0.0
    %900 = vmatpush2.msra.mxu0 0.0
    %901 = vmatprep.subr.mxu0 0.0
    %902 = vmatpush2.msra.mxu0 0.0
    %903 = vmatprep.subr.mxu0 0.0
    %904 = vmatpush2.msra.mxu0 0.0
    %905 = vmatprep.subr.mxu0 0.0
    %906 = vmatpush2.msra.mxu0 0.0
    %907 = vmatprep.subr.mxu0 0.0
    %908 = vmatpush2.msra.mxu0 0.0
    %909 = vmatprep.subr.mxu0 0.0
    %910 = vmatpush2.msra.mxu0 0.0
    %911 = vmatprep.subr.mxu0 0.0
    %912 = vmatpush2.msra.mxu0 0.0
    %913 = vmatprep.mubr.f32.mxu0 0.0
    %914 = vmatmul.mubr.f32.gmra.mxu0 %v673
    %v915 = vpop.f32.mrf.mxu0
    %v916 = vadd.f32 %v847, %v915
    %v917 = vpop.f32.mrf.mxu0
    %918 = vdwg.mxu0
    %v919 = vld [vmem:[#allocation6] sm:$0xff]
    %v920 = vld [vmem:[#allocation6 + $0x8] sm:$0xff]
    %v921 = vld [vmem:[#allocation6 + $0x10] sm:$0xff]
    %v922 = vld [vmem:[#allocation6 + $0x18] sm:$0xff]
    %v923 = vld [vmem:[#allocation6 + $0x20] sm:$0xff]
    %v924 = vld [vmem:[#allocation6 + $0x28] sm:$0xff]
    %v925 = vld [vmem:[#allocation6 + $0x30] sm:$0xff]
    %v926 = vld [vmem:[#allocation6 + $0x38] sm:$0xff]
    %v927 = vld [vmem:[%s9] sm:$0x1]
    %v929 = vlaneseq
    %v930 = vshrl.u32 %v929, 7
    %v931 = vsub.s32 0, %v930
    %v932 = vrot.slane %v927, %v931
    %v935 = vsel %vm385, %v656, 0
    %937 = vmatprep.subr.mxu0 0.0
    %938 = vmatpush1.msra.mxu0 0.0
    %939 = vmatprep.subr.mxu0 0.0
    %940 = vmatpush1.msra.mxu0 0.0
    %941 = vmatprep.subr.mxu0 0.0
    %942 = vmatpush1.msra.mxu0 0.0
    %943 = vmatprep.subr.mxu0 0.0
    %944 = vmatpush1.msra.mxu0 0.0
    %945 = vmatprep.subr.mxu0 0.0
    %946 = vmatpush1.msra.mxu0 0.0
    %947 = vmatprep.subr.mxu0 0.0
    %948 = vmatpush1.msra.mxu0 0.0
    %949 = vmatprep.subr.mxu0 0.0
    %950 = vmatpush1.msra.mxu0 0.0
    %951 = vmatprep.subr.mxu0 0.0
    %952 = vmatpush1.msra.mxu0 0.0
    %953 = vmatprep.subr.mxu0 0.0
    %954 = vmatpush1.msra.mxu0 %v926
    %955 = vmatprep.subr.mxu0 0.0
    %956 = vmatpush1.msra.mxu0 %v925
    %957 = vmatprep.subr.mxu0 0.0
    %958 = vmatpush1.msra.mxu0 %v924
    %959 = vmatprep.subr.mxu0 0.0
    %960 = vmatpush1.msra.mxu0 %v923
    %961 = vmatprep.subr.mxu0 0.0
    %962 = vmatpush1.msra.mxu0 %v922
    %963 = vmatprep.subr.mxu0 0.0
    %964 = vmatpush1.msra.mxu0 %v921
    %965 = vmatprep.subr.mxu0 0.0
    %966 = vmatpush1.msra.mxu0 %v920
    %967 = vmatprep.subr.mxu0 0.0
    %968 = vmatpush1.msra.mxu0 %v919
    %969 = vmatprep.subr.mxu0 0.0
    %970 = vmatpush2.msra.mxu0 0.0
    %971 = vmatprep.subr.mxu0 0.0
    %972 = vmatpush2.msra.mxu0 0.0
    %973 = vmatprep.subr.mxu0 0.0
    %974 = vmatpush2.msra.mxu0 0.0
    %975 = vmatprep.subr.mxu0 0.0
    %976 = vmatpush2.msra.mxu0 0.0
    %977 = vmatprep.subr.mxu0 0.0
    %978 = vmatpush2.msra.mxu0 0.0
    %979 = vmatprep.subr.mxu0 0.0
    %980 = vmatpush2.msra.mxu0 0.0
    %981 = vmatprep.subr.mxu0 0.0
    %982 = vmatpush2.msra.mxu0 0.0
    %983 = vmatprep.subr.mxu0 0.0
    %984 = vmatpush2.msra.mxu0 0.0
    %985 = vmatprep.subr.mxu0 0.0
    %986 = vmatpush2.msra.mxu0 0.0
    %987 = vmatprep.subr.mxu0 0.0
    %988 = vmatpush2.msra.mxu0 0.0
    %989 = vmatprep.subr.mxu0 0.0
    %990 = vmatpush2.msra.mxu0 0.0
    %991 = vmatprep.subr.mxu0 0.0
    %992 = vmatpush2.msra.mxu0 0.0
    %993 = vmatprep.subr.mxu0 0.0
    %994 = vmatpush2.msra.mxu0 0.0
    %995 = vmatprep.subr.mxu0 0.0
    %996 = vmatpush2.msra.mxu0 0.0
    %997 = vmatprep.subr.mxu0 0.0
    %998 = vmatpush2.msra.mxu0 0.0
    %999 = vmatprep.subr.mxu0 0.0
    %1000 = vmatpush2.msra.mxu0 0.0
    %1001 = vmatprep.mubr.f32.mxu0 0.0
    %1002 = vmatmul.mubr.f32.gmra.mxu0 %v935
    %v1003 = vpop.f32.mrf.mxu0
    %v1004 = vadd.f32 %v932, %v1003
    %v1005 = vpop.f32.mrf.mxu0
    %1006 = vdwg.mxu0
    %s1007 = scalar_lea.vmem [#allocation6], 64
    %v1008 = vld [vmem:[%s1007] sm:$0xff]
    %v1009 = vld [vmem:[%s1007 + $0x8] sm:$0xff]
    %v1010 = vld [vmem:[%s1007 + $0x10] sm:$0xff]
    %v1011 = vld [vmem:[%s1007 + $0x18] sm:$0xff]
    %v1012 = vld [vmem:[%s1007 + $0x20] sm:$0xff]
    %v1013 = vld [vmem:[%s1007 + $0x28] sm:$0xff]
    %v1014 = vld [vmem:[%s1007 + $0x30] sm:$0xff]
    %v1015 = vld [vmem:[%s1007 + $0x38] sm:$0xff]
    %s1016 = scalar_lea.vmem %s9, 1
    %v1017 = vld [vmem:[%s1016] sm:$0x1]
    %v1019 = vlaneseq
    %v1020 = vshrl.u32 %v1019, 7
    %v1021 = vsub.s32 0, %v1020
    %v1022 = vrot.slane %v1017, %v1021
    %1024 = vmatprep.subr.mxu0 0.0
    %1025 = vmatpush1.msra.mxu0 0.0
    %1026 = vmatprep.subr.mxu0 0.0
    %1027 = vmatpush1.msra.mxu0 0.0
    %1028 = vmatprep.subr.mxu0 0.0
    %1029 = vmatpush1.msra.mxu0 0.0
    %1030 = vmatprep.subr.mxu0 0.0
    %1031 = vmatpush1.msra.mxu0 0.0
    %1032 = vmatprep.subr.mxu0 0.0
    %1033 = vmatpush1.msra.mxu0 0.0
    %1034 = vmatprep.subr.mxu0 0.0
    %1035 = vmatpush1.msra.mxu0 0.0
    %1036 = vmatprep.subr.mxu0 0.0
    %1037 = vmatpush1.msra.mxu0 0.0
    %1038 = vmatprep.subr.mxu0 0.0
    %1039 = vmatpush1.msra.mxu0 0.0
    %1040 = vmatprep.subr.mxu0 0.0
    %1041 = vmatpush1.msra.mxu0 %v1015
    %1042 = vmatprep.subr.mxu0 0.0
    %1043 = vmatpush1.msra.mxu0 %v1014
    %1044 = vmatprep.subr.mxu0 0.0
    %1045 = vmatpush1.msra.mxu0 %v1013
    %1046 = vmatprep.subr.mxu0 0.0
    %1047 = vmatpush1.msra.mxu0 %v1012
    %1048 = vmatprep.subr.mxu0 0.0
    %1049 = vmatpush1.msra.mxu0 %v1011
    %1050 = vmatprep.subr.mxu0 0.0
    %1051 = vmatpush1.msra.mxu0 %v1010
    %1052 = vmatprep.subr.mxu0 0.0
    %1053 = vmatpush1.msra.mxu0 %v1009
    %1054 = vmatprep.subr.mxu0 0.0
    %1055 = vmatpush1.msra.mxu0 %v1008
    %1056 = vmatprep.subr.mxu0 0.0
    %1057 = vmatpush2.msra.mxu0 0.0
    %1058 = vmatprep.subr.mxu0 0.0
    %1059 = vmatpush2.msra.mxu0 0.0
    %1060 = vmatprep.subr.mxu0 0.0
    %1061 = vmatpush2.msra.mxu0 0.0
    %1062 = vmatprep.subr.mxu0 0.0
    %1063 = vmatpush2.msra.mxu0 0.0
    %1064 = vmatprep.subr.mxu0 0.0
    %1065 = vmatpush2.msra.mxu0 0.0
    %1066 = vmatprep.subr.mxu0 0.0
    %1067 = vmatpush2.msra.mxu0 0.0
    %1068 = vmatprep.subr.mxu0 0.0
    %1069 = vmatpush2.msra.mxu0 0.0
    %1070 = vmatprep.subr.mxu0 0.0
    %1071 = vmatpush2.msra.mxu0 0.0
    %1072 = vmatprep.subr.mxu0 0.0
    %1073 = vmatpush2.msra.mxu0 0.0
    %1074 = vmatprep.subr.mxu0 0.0
    %1075 = vmatpush2.msra.mxu0 0.0
    %1076 = vmatprep.subr.mxu0 0.0
    %1077 = vmatpush2.msra.mxu0 0.0
    %1078 = vmatprep.subr.mxu0 0.0
    %1079 = vmatpush2.msra.mxu0 0.0
    %1080 = vmatprep.subr.mxu0 0.0
    %1081 = vmatpush2.msra.mxu0 0.0
    %1082 = vmatprep.subr.mxu0 0.0
    %1083 = vmatpush2.msra.mxu0 0.0
    %1084 = vmatprep.subr.mxu0 0.0
    %1085 = vmatpush2.msra.mxu0 0.0
    %1086 = vmatprep.subr.mxu0 0.0
    %1087 = vmatpush2.msra.mxu0 0.0
    %1088 = vmatprep.mubr.f32.mxu0 0.0
    %1089 = vmatmul.mubr.f32.gmra.mxu0 %v935
    %v1090 = vpop.f32.mrf.mxu0
    %v1091 = vadd.f32 %v1022, %v1090
    %v1092 = vpop.f32.mrf.mxu0
    %1093 = vdwg.mxu0
    %s1094 = scalar_lea.vmem [#allocation6], 128
    %v1095 = vld [vmem:[%s1094] sm:$0xff]
    %v1096 = vld [vmem:[%s1094 + $0x8] sm:$0xff]
    %v1097 = vld [vmem:[%s1094 + $0x10] sm:$0xff]
    %v1098 = vld [vmem:[%s1094 + $0x18] sm:$0xff]
    %v1099 = vld [vmem:[%s1094 + $0x20] sm:$0xff]
    %v1100 = vld [vmem:[%s1094 + $0x28] sm:$0xff]
    %v1101 = vld [vmem:[%s1094 + $0x30] sm:$0xff]
    %v1102 = vld [vmem:[%s1094 + $0x38] sm:$0xff]
    %s1103 = scalar_lea.vmem %s9, 2
    %v1104 = vld [vmem:[%s1103] sm:$0x1]
    %v1106 = vlaneseq
    %v1107 = vshrl.u32 %v1106, 7
    %v1108 = vsub.s32 0, %v1107
    %v1109 = vrot.slane %v1104, %v1108
    %1111 = vmatprep.subr.mxu0 0.0
    %1112 = vmatpush1.msra.mxu0 0.0
    %1113 = vmatprep.subr.mxu0 0.0
    %1114 = vmatpush1.msra.mxu0 0.0
    %1115 = vmatprep.subr.mxu0 0.0
    %1116 = vmatpush1.msra.mxu0 0.0
    %1117 = vmatprep.subr.mxu0 0.0
    %1118 = vmatpush1.msra.mxu0 0.0
    %1119 = vmatprep.subr.mxu0 0.0
    %1120 = vmatpush1.msra.mxu0 0.0
    %1121 = vmatprep.subr.mxu0 0.0
    %1122 = vmatpush1.msra.mxu0 0.0
    %1123 = vmatprep.subr.mxu0 0.0
    %1124 = vmatpush1.msra.mxu0 0.0
    %1125 = vmatprep.subr.mxu0 0.0
    %1126 = vmatpush1.msra.mxu0 0.0
    %1127 = vmatprep.subr.mxu0 0.0
    %1128 = vmatpush1.msra.mxu0 %v1102
    %1129 = vmatprep.subr.mxu0 0.0
    %1130 = vmatpush1.msra.mxu0 %v1101
    %1131 = vmatprep.subr.mxu0 0.0
    %1132 = vmatpush1.msra.mxu0 %v1100
    %1133 = vmatprep.subr.mxu0 0.0
    %1134 = vmatpush1.msra.mxu0 %v1099
    %1135 = vmatprep.subr.mxu0 0.0
    %1136 = vmatpush1.msra.mxu0 %v1098
    %1137 = vmatprep.subr.mxu0 0.0
    %1138 = vmatpush1.msra.mxu0 %v1097
    %1139 = vmatprep.subr.mxu0 0.0
    %1140 = vmatpush1.msra.mxu0 %v1096
    %1141 = vmatprep.subr.mxu0 0.0
    %1142 = vmatpush1.msra.mxu0 %v1095
    %1143 = vmatprep.subr.mxu0 0.0
    %1144 = vmatpush2.msra.mxu0 0.0
    %1145 = vmatprep.subr.mxu0 0.0
    %1146 = vmatpush2.msra.mxu0 0.0
    %1147 = vmatprep.subr.mxu0 0.0
    %1148 = vmatpush2.msra.mxu0 0.0
    %1149 = vmatprep.subr.mxu0 0.0
    %1150 = vmatpush2.msra.mxu0 0.0
    %1151 = vmatprep.subr.mxu0 0.0
    %1152 = vmatpush2.msra.mxu0 0.0
    %1153 = vmatprep.subr.mxu0 0.0
    %1154 = vmatpush2.msra.mxu0 0.0
    %1155 = vmatprep.subr.mxu0 0.0
    %1156 = vmatpush2.msra.mxu0 0.0
    %1157 = vmatprep.subr.mxu0 0.0
    %1158 = vmatpush2.msra.mxu0 0.0
    %1159 = vmatprep.subr.mxu0 0.0
    %1160 = vmatpush2.msra.mxu0 0.0
    %1161 = vmatprep.subr.mxu0 0.0
    %1162 = vmatpush2.msra.mxu0 0.0
    %1163 = vmatprep.subr.mxu0 0.0
    %1164 = vmatpush2.msra.mxu0 0.0
    %1165 = vmatprep.subr.mxu0 0.0
    %1166 = vmatpush2.msra.mxu0 0.0
    %1167 = vmatprep.subr.mxu0 0.0
    %1168 = vmatpush2.msra.mxu0 0.0
    %1169 = vmatprep.subr.mxu0 0.0
    %1170 = vmatpush2.msra.mxu0 0.0
    %1171 = vmatprep.subr.mxu0 0.0
    %1172 = vmatpush2.msra.mxu0 0.0
    %1173 = vmatprep.subr.mxu0 0.0
    %1174 = vmatpush2.msra.mxu0 0.0
    %1175 = vmatprep.mubr.f32.mxu0 0.0
    %1176 = vmatmul.mubr.f32.gmra.mxu0 %v935
    %v1177 = vpop.f32.mrf.mxu0
    %v1178 = vadd.f32 %v1109, %v1177
    %v1179 = vpop.f32.mrf.mxu0
    %1180 = vdwg.mxu0
    %v1181 = vadd.f32 %v742, %v1004
    %v1182 = vxor.u32 %v1181, 2147483648
    %v1183 = vmul.f32 %v1182, 1.442695
    %v1184 = vpow.pop %v1183
    %v1185 = vadd.f32 %v1184, 1.0
    %v1186 = vrcp.pop %v1185
    %v1187 = vmul.f32 1.0, %v1186
    %v1188 = vadd.f32 %v829, %v1091
    %v1189 = vxor.u32 %v1188, 2147483648
    %v1190 = vmul.f32 %v1189, 1.442695
    %v1191 = vpow.pop %v1190
    %v1192 = vadd.f32 %v1191, 1.0
    %v1193 = vrcp.pop %v1192
    %v1194 = vmul.f32 1.0, %v1193
    %v1195 = vmul.f32 %v1187, %v1178
    %v1196 = vadd.f32 %v916, %v1195
    %v1197 = vtanh.pop %v1196
    %v1198 = vsub.f32 1.0, %v1194
    %v1199 = vmul.f32 %v1198, %v1197
    %v1200 = vmul.f32 %v1194, %v656
    %v1201 = vadd.f32 %v1199, %v1200
    %s1202 = scalar_lea.vmem %s15, 8
    %1203 = vst.msk [vmem:[%s1202] sm:$0xff] %vm385, %v1201
    %v1204 = vld [vmem:[#allocation9] sm:$0xff]
    %v1205 = vld [vmem:[#allocation9 + $0x8] sm:$0xff]
    %v1206 = vld [vmem:[#allocation9 + $0x10] sm:$0xff]
    %v1207 = vld [vmem:[#allocation9 + $0x18] sm:$0xff]
    %v1208 = vld [vmem:[#allocation9 + $0x20] sm:$0xff]
    %v1209 = vld [vmem:[#allocation9 + $0x28] sm:$0xff]
    %v1210 = vld [vmem:[#allocation9 + $0x30] sm:$0xff]
    %v1211 = vld [vmem:[#allocation9 + $0x38] sm:$0xff]
    %v1212 = vld [vmem:[%s11] sm:$0x1]
    %v1214 = vlaneseq
    %v1215 = vshrl.u32 %v1214, 7
    %v1216 = vsub.s32 0, %v1215
    %v1217 = vrot.slane %v1212, %v1216
    %v1220 = vsel %vm385, %v1201, 0
    %1222 = vmatprep.subr.mxu0 0.0
    %1223 = vmatpush1.msra.mxu0 0.0
    %1224 = vmatprep.subr.mxu0 0.0
    %1225 = vmatpush1.msra.mxu0 0.0
    %1226 = vmatprep.subr.mxu0 0.0
    %1227 = vmatpush1.msra.mxu0 0.0
    %1228 = vmatprep.subr.mxu0 0.0
    %1229 = vmatpush1.msra.mxu0 0.0
    %1230 = vmatprep.subr.mxu0 0.0
    %1231 = vmatpush1.msra.mxu0 0.0
    %1232 = vmatprep.subr.mxu0 0.0
    %1233 = vmatpush1.msra.mxu0 0.0
    %1234 = vmatprep.subr.mxu0 0.0
    %1235 = vmatpush1.msra.mxu0 0.0
    %1236 = vmatprep.subr.mxu0 0.0
    %1237 = vmatpush1.msra.mxu0 0.0
    %1238 = vmatprep.subr.mxu0 0.0
    %1239 = vmatpush1.msra.mxu0 %v1211
    %1240 = vmatprep.subr.mxu0 0.0
    %1241 = vmatpush1.msra.mxu0 %v1210
    %1242 = vmatprep.subr.mxu0 0.0
    %1243 = vmatpush1.msra.mxu0 %v1209
    %1244 = vmatprep.subr.mxu0 0.0
    %1245 = vmatpush1.msra.mxu0 %v1208
    %1246 = vmatprep.subr.mxu0 0.0
    %1247 = vmatpush1.msra.mxu0 %v1207
    %1248 = vmatprep.subr.mxu0 0.0
    %1249 = vmatpush1.msra.mxu0 %v1206
    %1250 = vmatprep.subr.mxu0 0.0
    %1251 = vmatpush1.msra.mxu0 %v1205
    %1252 = vmatprep.subr.mxu0 0.0
    %1253 = vmatpush1.msra.mxu0 %v1204
    %1254 = vmatprep.subr.mxu0 0.0
    %1255 = vmatpush2.msra.mxu0 0.0
    %1256 = vmatprep.subr.mxu0 0.0
    %1257 = vmatpush2.msra.mxu0 0.0
    %1258 = vmatprep.subr.mxu0 0.0
    %1259 = vmatpush2.msra.mxu0 0.0
    %1260 = vmatprep.subr.mxu0 0.0
    %1261 = vmatpush2.msra.mxu0 0.0
    %1262 = vmatprep.subr.mxu0 0.0
    %1263 = vmatpush2.msra.mxu0 0.0
    %1264 = vmatprep.subr.mxu0 0.0
    %1265 = vmatpush2.msra.mxu0 0.0
    %1266 = vmatprep.subr.mxu0 0.0
    %1267 = vmatpush2.msra.mxu0 0.0
    %1268 = vmatprep.subr.mxu0 0.0
    %1269 = vmatpush2.msra.mxu0 0.0
    %1270 = vmatprep.subr.mxu0 0.0
    %1271 = vmatpush2.msra.mxu0 0.0
    %1272 = vmatprep.subr.mxu0 0.0
    %1273 = vmatpush2.msra.mxu0 0.0
    %1274 = vmatprep.subr.mxu0 0.0
    %1275 = vmatpush2.msra.mxu0 0.0
    %1276 = vmatprep.subr.mxu0 0.0
    %1277 = vmatpush2.msra.mxu0 0.0
    %1278 = vmatprep.subr.mxu0 0.0
    %1279 = vmatpush2.msra.mxu0 0.0
    %1280 = vmatprep.subr.mxu0 0.0
    %1281 = vmatpush2.msra.mxu0 0.0
    %1282 = vmatprep.subr.mxu0 0.0
    %1283 = vmatpush2.msra.mxu0 0.0
    %1284 = vmatprep.subr.mxu0 0.0
    %1285 = vmatpush2.msra.mxu0 0.0
    %1286 = vmatprep.mubr.f32.mxu0 0.0
    %1287 = vmatmul.mubr.f32.gmra.mxu0 %v1220
    %v1288 = vpop.f32.mrf.mxu0
    %v1289 = vadd.f32 %v1217, %v1288
    %v1290 = vpop.f32.mrf.mxu0
    %1291 = vdwg.mxu0
    %v1292 = vld [vmem:[%s12] sm:$0xff]
    %v1293 = vld [vmem:[%s12 + $0x8] sm:$0xff]
    %v1294 = vld [vmem:[%s12 + $0x10] sm:$0xff]
    %v1295 = vld [vmem:[%s12 + $0x18] sm:$0xff]
    %v1296 = vld [vmem:[%s12 + $0x20] sm:$0xff]
    %v1297 = vld [vmem:[%s12 + $0x28] sm:$0xff]
    %v1298 = vld [vmem:[%s12 + $0x30] sm:$0xff]
    %v1299 = vld [vmem:[%s12 + $0x38] sm:$0xff]
    %v1300 = vld [vmem:[%s12 + $0x40] sm:$0xff]
    %v1301 = vld [vmem:[%s12 + $0x48] sm:$0xff]
    %v1302 = vld [vmem:[%s12 + $0x50] sm:$0xff]
    %v1303 = vld [vmem:[%s12 + $0x58] sm:$0xff]
    %v1304 = vld [vmem:[%s12 + $0x60] sm:$0xff]
    %v1305 = vld [vmem:[%s12 + $0x68] sm:$0xff]
    %v1306 = vld [vmem:[%s12 + $0x70] sm:$0xff]
    %v1307 = vld [vmem:[%s12 + $0x78] sm:$0xff]
    %v1308 = vld [vmem:[%s12 + $0x80] sm:$0xff]
    %v1309 = vld [vmem:[%s12 + $0x88] sm:$0xff]
    %v1310 = vld [vmem:[%s12 + $0x90] sm:$0xff]
    %v1311 = vld [vmem:[%s12 + $0x98] sm:$0xff]
    %v1312 = vld [vmem:[%s12 + $0xa0] sm:$0xff]
    %v1313 = vld [vmem:[%s12 + $0xa8] sm:$0xff]
    %v1314 = vld [vmem:[%s12 + $0xb0] sm:$0xff]
    %v1315 = vld [vmem:[%s12 + $0xb8] sm:$0xff]
    %v1316 = vld [vmem:[%s12 + $0xc0] sm:$0xff]
    %v1317 = vld [vmem:[%s12 + $0xc8] sm:$0xff]
    %v1318 = vld [vmem:[%s12 + $0xd0] sm:$0xff]
    %v1319 = vld [vmem:[%s12 + $0xd8] sm:$0xff]
    %v1320 = vld [vmem:[%s12 + $0xe0] sm:$0xff]
    %v1321 = vld [vmem:[%s12 + $0xe8] sm:$0xff]
    %v1322 = vld [vmem:[%s12 + $0xf0] sm:$0xff]
    %v1323 = vld [vmem:[%s12 + $0xf8] sm:$0xff]
    %v1324 = vld [vmem:[%s13] sm:$0x3]
    %v1326 = vlaneseq
    %v1327 = vshrl.u32 %v1326, 7
    %v1328 = vsub.s32 0, %v1327
    %v1329 = vrot.slane %v1324, %v1328
    %v1330 = vlaneseq
    %v1331 = vshrl.u32 %v1330, 7
    %v1332 = vsub.s32 1, %v1331
    %v1333 = vrot.slane %v1324, %v1332
    %1336 = vmatprep.subr.mxu0 %v1323
    %1337 = vmatpush1.msra.mxu0 %v1322
    %1338 = vmatprep.subr.mxu0 %v1321
    %1339 = vmatpush1.msra.mxu0 %v1320
    %1340 = vmatprep.subr.mxu0 %v1319
    %1341 = vmatpush1.msra.mxu0 %v1318
    %1342 = vmatprep.subr.mxu0 %v1317
    %1343 = vmatpush1.msra.mxu0 %v1316
    %1344 = vmatprep.subr.mxu0 %v1315
    %1345 = vmatpush1.msra.mxu0 %v1314
    %1346 = vmatprep.subr.mxu0 %v1313
    %1347 = vmatpush1.msra.mxu0 %v1312
    %1348 = vmatprep.subr.mxu0 %v1311
    %1349 = vmatpush1.msra.mxu0 %v1310
    %1350 = vmatprep.subr.mxu0 %v1309
    %1351 = vmatpush1.msra.mxu0 %v1308
    %1352 = vmatprep.subr.mxu0 %v1307
    %1353 = vmatpush1.msra.mxu0 %v1306
    %1354 = vmatprep.subr.mxu0 %v1305
    %1355 = vmatpush1.msra.mxu0 %v1304
    %1356 = vmatprep.subr.mxu0 %v1303
    %1357 = vmatpush1.msra.mxu0 %v1302
    %1358 = vmatprep.subr.mxu0 %v1301
    %1359 = vmatpush1.msra.mxu0 %v1300
    %1360 = vmatprep.subr.mxu0 %v1299
    %1361 = vmatpush1.msra.mxu0 %v1298
    %1362 = vmatprep.subr.mxu0 %v1297
    %1363 = vmatpush1.msra.mxu0 %v1296
    %1364 = vmatprep.subr.mxu0 %v1295
    %1365 = vmatpush1.msra.mxu0 %v1294
    %1366 = vmatprep.subr.mxu0 %v1293
    %1367 = vmatpush1.msra.mxu0 %v1292
    %1368 = vmatprep.subr.mxu0 0.0
    %1369 = vmatpush2.msra.mxu0 0.0
    %1370 = vmatprep.subr.mxu0 0.0
    %1371 = vmatpush2.msra.mxu0 0.0
    %1372 = vmatprep.subr.mxu0 0.0
    %1373 = vmatpush2.msra.mxu0 0.0
    %1374 = vmatprep.subr.mxu0 0.0
    %1375 = vmatpush2.msra.mxu0 0.0
    %1376 = vmatprep.subr.mxu0 0.0
    %1377 = vmatpush2.msra.mxu0 0.0
    %1378 = vmatprep.subr.mxu0 0.0
    %1379 = vmatpush2.msra.mxu0 0.0
    %1380 = vmatprep.subr.mxu0 0.0
    %1381 = vmatpush2.msra.mxu0 0.0
    %1382 = vmatprep.subr.mxu0 0.0
    %1383 = vmatpush2.msra.mxu0 0.0
    %1384 = vmatprep.subr.mxu0 0.0
    %1385 = vmatpush2.msra.mxu0 0.0
    %1386 = vmatprep.subr.mxu0 0.0
    %1387 = vmatpush2.msra.mxu0 0.0
    %1388 = vmatprep.subr.mxu0 0.0
    %1389 = vmatpush2.msra.mxu0 0.0
    %1390 = vmatprep.subr.mxu0 0.0
    %1391 = vmatpush2.msra.mxu0 0.0
    %1392 = vmatprep.subr.mxu0 0.0
    %1393 = vmatpush2.msra.mxu0 0.0
    %1394 = vmatprep.subr.mxu0 0.0
    %1395 = vmatpush2.msra.mxu0 0.0
    %1396 = vmatprep.subr.mxu0 0.0
    %1397 = vmatpush2.msra.mxu0 0.0
    %1398 = vmatprep.subr.mxu0 0.0
    %1399 = vmatpush2.msra.mxu0 0.0
    %1400 = vmatprep.mubr.f32.mxu0 0.0
    %1401 = vmatmul.mubr.f32.gmra.mxu0 %v1289
    %v1402 = vpop.f32.mrf.mxu0
    %v1403 = vadd.f32 %v1329, %v1402
    %v1404 = vpop.f32.mrf.mxu0
    %v1405 = vadd.f32 %v1333, %v1404
    %1406 = vdwg.mxu0
    %v1407 = vpack.c.bf16 %v1403, %v1403
    %v1408 = vpack.c.bf16 %v1405, %v1405
    %v1411 = vunpack.c.l.b16 %v1407
    %v1412 = vunpack.c.l.b16 %v1408
    %v1413 = vpack.c.b16 %v1412, %v1411
    %1415 = vst [vmem:[%s14] sm:$0xff] %v1413
    // Predicated region
    $region78: #{decoder_forward.2} parent=1 // pred_check
      _
    $region79: #{decoder_forward.2} parent=1 // pred_check_branch
      %1417 = sbr.rel (0) target = $region81
    $region80: #{decoder_forward.2} parent=1 // pred_region
      _
    $region81: #{decoder_forward.2} parent=1 // pred_fallthru
      _
    // Predicated region
    $region82: #{decoder_forward.2} parent=1 // pred_check
      _
    $region83: #{decoder_forward.2} parent=1 // pred_check_branch
      %1419 = sbr.rel (0) target = $region85
    $region84: #{decoder_forward.2} parent=1 // pred_region
      _
    $region85: #{decoder_forward.2} parent=1 // pred_fallthru
      _
    // Predicated region
    $region86: #{decoder_forward.2} parent=1 // pred_check
      _
    $region87: #{decoder_forward.2} parent=1 // pred_check_branch
      %1421 = sbr.rel (0) target = $region89
    $region88: #{decoder_forward.2} parent=1 // pred_region
      _
    $region89: #{decoder_forward.2} parent=1 // pred_fallthru
      _
    // Predicated region
    $region90: #{decoder_forward.2} parent=1 // pred_check
      _
    $region91: #{decoder_forward.2} parent=1 // pred_check_branch
      %1423 = sbr.rel (0) target = $region93
    $region92: #{decoder_forward.2} parent=1 // pred_region
      _
    $region93: #{decoder_forward.2} parent=1 // pred_fallthru
      _
    %1424 = vsyncpa [#allocation3], 1
    %1425 = vsyncpa [#allocation5], 1
    %1426 = vsyncpa [#allocation8], 1

</llo_original>
